<compile_context>
chip_gen: v7x
topology: tpu7x:2x2x1
jax: 0.10.0
libtpu: 0.0.40
codegen_flags: <defaults>
</compile_context>

<pallas_src>
import functools
import math

import jax
import jax.numpy as jnp
from jax.experimental import pallas as pl
from jax.experimental.pallas import tpu as pltpu

EPS = 1e-5
NEG_SLOPE = 0.01          # F.leaky_relu default negative_slope
LANE = 128
SUBLANE = 8
DEFAULT_ROW_BLOCK = 512   # row-tile target; fits comfortably in 64 MiB VMEM (v7x)
VMEM_LIMIT = 48 * 1024 * 1024


# ----------------------------- Pallas kernels ----------------------------- #

def conv_stats_kernel(p_ref, w_ref, g_ref, b_ref,
                      y_ref, scale_ref, shift_ref,
                      sum_acc, sq_acc, *, inv_n):
    """Pass A: y_tile = patches_tile @ W (bf16 MXU, f32 acc); accumulate
    per-column sum / sum-of-squares across row tiles; on the last tile fold
    BatchNorm (batch stats) + gamma/beta into per-channel scale & shift."""
    i = pl.program_id(0)

    @pl.when(i == 0)
    def _():
        sum_acc[...] = jnp.zeros_like(sum_acc)
        sq_acc[...] = jnp.zeros_like(sq_acc)

    acc = jnp.dot(p_ref[...], w_ref[...], preferred_element_type=jnp.float32)
    y_ref[...] = acc.astype(y_ref.dtype)
    sum_acc[...] += jnp.sum(acc, axis=0, keepdims=True)
    sq_acc[...] += jnp.sum(acc * acc, axis=0, keepdims=True)

    @pl.when(i == pl.num_programs(0) - 1)
    def _():
        mean = sum_acc[...] * inv_n
        var = jnp.maximum(sq_acc[...] * inv_n - mean * mean, 0.0)  # biased var
        scale = g_ref[...] * jax.lax.rsqrt(var + EPS)
        scale_ref[...] = scale
        shift_ref[...] = b_ref[...] - mean * scale


def bn_act_kernel(y_ref, scale_ref, shift_ref, o_ref):
    """Pass B (conv1): out = leaky_relu(y * scale + shift).  f32 VPU math."""
    z = y_ref[...].astype(jnp.float32) * scale_ref[...] + shift_ref[...]
    o_ref[...] = jnp.where(z >= 0, z, NEG_SLOPE * z).astype(o_ref.dtype)


def bn_add_act_kernel(y_ref, scale_ref, shift_ref, sc_ref, o_ref):
    """Pass B (conv2): out = leaky_relu(y * scale + shift + shortcut)."""
    z = (y_ref[...].astype(jnp.float32) * scale_ref[...] + shift_ref[...]
         + sc_ref[...].astype(jnp.float32))
    o_ref[...] = jnp.where(z >= 0, z, NEG_SLOPE * z).astype(o_ref.dtype)


# ------------------------------ pallas_call wrappers ----------------------- #

def _const_spec(shape):
    return pl.BlockSpec(shape, lambda i: (0, 0))


def conv_stats(patches, w_mat, gamma, beta, *, n_rows, row_block,
               y_dtype=jnp.float32):
    rows_p, kkc = patches.shape
    cout = w_mat.shape[1]
    grid = rows_p // row_block
    kern = functools.partial(conv_stats_kernel, inv_n=1.0 / float(n_rows))
    return pl.pallas_call(
        kern,
        out_shape=(jax.ShapeDtypeStruct((rows_p, cout), y_dtype),
                   jax.ShapeDtypeStruct((1, cout), jnp.float32),
                   jax.ShapeDtypeStruct((1, cout), jnp.float32)),
        grid=(grid,),
        in_specs=[pl.BlockSpec((row_block, kkc), lambda i: (i, 0)),
                  _const_spec((kkc, cout)),
                  _const_spec((1, cout)),
                  _const_spec((1, cout))],
        out_specs=(pl.BlockSpec((row_block, cout), lambda i: (i, 0)),
                   _const_spec((1, cout)),       # stays VMEM-resident across grid
                   _const_spec((1, cout))),
        scratch_shapes=[pltpu.VMEM((1, cout), jnp.float32),
                        pltpu.VMEM((1, cout), jnp.float32)],
        compiler_params=pltpu.CompilerParams(
            # row axis is a reduction into scale/shift -> must stay "arbitrary"
            dimension_semantics=("arbitrary",),
            vmem_limit_bytes=VMEM_LIMIT),
    )(patches, w_mat, gamma, beta)


def bn_act(y, scale, shift, *, row_block, out_dtype):
    rows_p, cout = y.shape
    grid = rows_p // row_block
    return pl.pallas_call(
        bn_act_kernel,
        out_shape=jax.ShapeDtypeStruct((rows_p, cout), out_dtype),
        grid=(grid,),
        in_specs=[pl.BlockSpec((row_block, cout), lambda i: (i, 0)),
                  _const_spec((1, cout)),
                  _const_spec((1, cout))],
        out_specs=pl.BlockSpec((row_block, cout), lambda i: (i, 0)),
        compiler_params=pltpu.CompilerParams(
            dimension_semantics=("parallel",),    # shards across v7x's 2 TCs
            vmem_limit_bytes=VMEM_LIMIT),
    )(y, scale, shift)


def bn_add_act(y, scale, shift, sc, *, row_block, out_dtype):
    rows_p, cout = y.shape
    grid = rows_p // row_block
    return pl.pallas_call(
        bn_add_act_kernel,
        out_shape=jax.ShapeDtypeStruct((rows_p, cout), out_dtype),
        grid=(grid,),
        in_specs=[pl.BlockSpec((row_block, cout), lambda i: (i, 0)),
                  _const_spec((1, cout)),
                  _const_spec((1, cout)),
                  pl.BlockSpec((row_block, cout), lambda i: (i, 0))],
        out_specs=pl.BlockSpec((row_block, cout), lambda i: (i, 0)),
        compiler_params=pltpu.CompilerParams(
            dimension_semantics=("parallel",),
            vmem_limit_bytes=VMEM_LIMIT),
    )(y, scale, shift, sc)


# ------------------------------ JAX glue (im2col etc.) --------------------- #

def _round_up(x, m):
    return (x + m - 1) // m * m


def _choose_tile(rows, target):
    rows8 = _round_up(rows, SUBLANE)
    tm = min(_round_up(target, SUBLANE), rows8)
    rows_p = _round_up(rows8, tm)
    return tm, rows_p


def _pad2d(a, rows, cols):
    return jnp.pad(a, ((0, rows - a.shape[0]), (0, cols - a.shape[1])))


def _pad_vec(v, cols):
    v = v.reshape(1, -1).astype(jnp.float32)
    return jnp.pad(v, ((0, 0), (0, cols - v.shape[1])))


def im2col(x_nhwc, k, stride, pad):
    """x: NHWC -> (N*Ho*Wo, k*k*C), column ordering (dy, dx, c)."""
    if pad:
        x_nhwc = jnp.pad(x_nhwc, ((0, 0), (pad, pad), (pad, pad), (0, 0)))
    n, hp, wp, c = x_nhwc.shape
    ho = (hp - k) // stride + 1
    wo = (wp - k) // stride + 1
    cols = []
    for dy in range(k):
        for dx in range(k):
            cols.append(x_nhwc[:, dy:dy + (ho - 1) * stride + 1:stride,
                               dx:dx + (wo - 1) * stride + 1:stride, :])
    p = jnp.stack(cols, axis=3)                    # (N, Ho, Wo, k*k, C)
    return p.reshape(n * ho * wo, k * k * c), (ho, wo)


def oihw_to_matmul(w):
    """PyTorch OIHW conv weight -> (kh*kw*Cin, Cout) matching im2col ordering."""
    cout, cin, kh, kw = w.shape
    return jnp.transpose(w, (2, 3, 1, 0)).reshape(kh * kw * cin, cout)


def basic_block_forward(x_nchw, params, stride, mod=True,
                        row_block=DEFAULT_ROW_BLOCK):
    """Forward of BasicBlock (mod=True).  Input/output layout: NCHW (PyTorch)."""
    assert mod, "mod=False (1x1 conv + BN shortcut) not implemented"
    w1, g1, b1, w2, g2, b2 = params
    n, cin, h, w = x_nchw.shape
    planes = w1.shape[0]
    cout_p = _round_up(planes, LANE)               # lane-dense output channels

    x = jnp.transpose(x_nchw, (0, 2, 3, 1)).astype(jnp.float32)   # NHWC

    # ---- conv1 (3x3, stride=s, pad=1) + bn1 + leaky_relu ----
    p1, (ho, wo) = im2col(x, 3, stride, 1)
    rows = n * ho * wo
    tm, rows_p = _choose_tile(rows, row_block)
    kkc1 = _round_up(9 * cin, SUBLANE)
    p1 = _pad2d(p1, rows_p, kkc1).astype(jnp.bfloat16)
    w1m = _pad2d(oihw_to_matmul(w1), kkc1, cout_p).astype(jnp.bfloat16)
    y1, sc1, sh1 = conv_stats(p1, w1m, _pad_vec(g1, cout_p), _pad_vec(b1, cout_p),
                              n_rows=rows, row_block=tm)
    out1 = bn_act(y1, sc1, sh1, row_block=tm, out_dtype=jnp.bfloat16)
    out1_nhwc = out1[:rows, :planes].reshape(n, ho, wo, planes)   # bf16 roundtrip

    # ---- conv2 (3x3, stride=1, pad=1) + bn2 ----
    p2, _ = im2col(out1_nhwc, 3, 1, 1)
    kkc2 = _round_up(9 * planes, SUBLANE)
    p2 = _pad2d(p2, rows_p, kkc2).astype(jnp.bfloat16)
    w2m = _pad2d(oihw_to_matmul(w2), kkc2, cout_p).astype(jnp.bfloat16)
    y2, sc2, sh2 = conv_stats(p2, w2m, _pad_vec(g2, cout_p), _pad_vec(b2, cout_p),
                              n_rows=rows, row_block=tm)

    # ---- shortcut: AvgPoolShortCut (mod=True) / identity — pooled in glue,
    #      channel-padded, added on the VPU inside the final kernel ----
    if stride != 1 or cin != planes:
        if h % 2 != 0:                              # F.avg_pool2d(x, 1, stride)
            sc_nhwc = x[:, ::stride, ::stride, :]
        else:                                       # F.avg_pool2d(x, stride, stride)
            sc_nhwc = x.reshape(n, h // stride, stride, w // stride, stride,
                                cin).mean(axis=(2, 4))
    else:
        sc_nhwc = x                                 # identity shortcut
    sc_flat = sc_nhwc.reshape(-1, cin)
    sc_flat = _pad2d(sc_flat, rows_p, cout_p).astype(jnp.bfloat16)

    out2 = bn_add_act(y2, sc2, sh2, sc_flat, row_block=tm, out_dtype=jnp.float32)
    out_nhwc = out2[:rows, :planes].reshape(n, ho, wo, planes)
    return jnp.transpose(out_nhwc, (0, 3, 1, 2))    # back to NCHW


# ------------------------------ pure-JAX reference ------------------------- #

def reference_forward(x, w1, g1, b1, w2, g2, b2, stride):
    def conv(xx, ww, s):
        return jax.lax.conv_general_dilated(
            xx, ww, (s, s), ((1, 1), (1, 1)),
            dimension_numbers=("NCHW", "OIHW", "NCHW"))

    def bn(xx, g, b):
        mean = jnp.mean(xx, axis=(0, 2, 3), keepdims=True)
        var = jnp.mean((xx - mean) ** 2, axis=(0, 2, 3), keepdims=True)
        return ((xx - mean) * jax.lax.rsqrt(var + EPS)
                * g.reshape(1, -1, 1, 1) + b.reshape(1, -1, 1, 1))

    def lrelu(xx):
        return jnp.where(xx >= 0, xx, NEG_SLOPE * xx)

    out = lrelu(bn(conv(x, w1, stride), g1, b1))
    out = bn(conv(out, w2, 1), g2, b2)
    n, c, h, w = x.shape
    sc = x.reshape(n, c, h // stride, stride, w // stride, stride).mean(axis=(3, 5))
    sc = jnp.pad(sc, ((0, 0), (0, w1.shape[0] - c), (0, 0), (0, 0)))
    return lrelu(out + sc)


# ---------------------------------- main ----------------------------------- #

if __name__ == "__main__":
    key = jax.random.PRNGKey(0)
    k_x, k_w1, k_w2, k_g1, k_b1, k_g2, k_b2 = jax.random.split(key, 7)

    N, in_planes, planes, H, W, stride = 2, 4, 8, 16, 16, 2
    x = jax.random.normal(k_x, (N, in_planes, H, W), dtype=jnp.float32)

    # deterministic synthetic parameters (shapes per the PyTorch module)
    w1 = 0.2 * jax.random.normal(k_w1, (planes, in_planes, 3, 3), dtype=jnp.float32)
    w2 = 0.2 * jax.random.normal(k_w2, (planes, planes, 3, 3), dtype=jnp.float32)
    g1 = jax.random.uniform(k_g1, (planes,), minval=0.5, maxval=1.5, dtype=jnp.float32)
    b1 = 0.1 * jax.random.normal(k_b1, (planes,), dtype=jnp.float32)
    g2 = jax.random.uniform(k_g2, (planes,), minval=0.5, maxval=1.5, dtype=jnp.float32)
    b2 = 0.1 * jax.random.normal(k_b2, (planes,), dtype=jnp.float32)

    params = (w1, g1, b1, w2, g2, b2)
    ref = jax.block_until_ready(reference_forward(x, w1, g1, b1, w2, g2, b2, stride))

    fwd = jax.jit(basic_block_forward, static_argnames=("stride", "mod", "row_block"))

    # default row tiling (single tile at this toy size)
    out = jax.block_until_ready(fwd(x, params, stride=stride, mod=True))
    assert out.shape == (N, planes, math.ceil(H / stride), math.ceil(W / stride))
    assert jnp.allclose(out, ref, rtol=5e-2, atol=5e-2), \
        f"max abs err {jnp.max(jnp.abs(out - ref))}"

    # small row tile -> grid of 4 tiles: exercises the pipelined multi-tile path
    # and the cross-tile BatchNorm sum/sumsq accumulation.
    out_tiled = jax.block_until_ready(
        fwd(x, params, stride=stride, mod=True, row_block=32))
    assert jnp.allclose(out_tiled, ref, rtol=5e-2, atol=5e-2), \
        f"max abs err (tiled) {jnp.max(jnp.abs(out_tiled - ref))}"

    print("KERNEL_OK")
</pallas_src>

<mosaic_0001>
module attributes {stable_mosaic.version = 11 : i64} {
  func.func @conv_stats_kernel(%arg0: i32, %arg1: memref<128x40xbf16, #tpu.memory_space<vmem>>, %arg2: memref<40x128xbf16, #tpu.memory_space<vmem>>, %arg3: memref<1x128xf32, #tpu.memory_space<vmem>>, %arg4: memref<1x128xf32, #tpu.memory_space<vmem>>, %arg5: memref<128x128xf32, #tpu.memory_space<vmem>>, %arg6: memref<1x128xf32, #tpu.memory_space<vmem>>, %arg7: memref<1x128xf32, #tpu.memory_space<vmem>>, %arg8: memref<1x128xf32, #tpu.memory_space<vmem>>, %arg9: memref<1x128xf32, #tpu.memory_space<vmem>>) attributes {dimension_semantics = [#tpu.dimension_semantics<arbitrary>], iteration_bounds = array<i64: 1>, scalar_prefetch = 0 : i64, scratch_operands = 2 : i64, tpu.core_type = #tpu.core_type<tc>, window_params = [{transform_indices = @transform_0, window_bounds = array<i64: 128, 40>}, {pipeline_mode = #tpu.pipeline_mode<synchronous>, transform_indices = @transform_1, window_bounds = array<i64: 40, 128>}, {pipeline_mode = #tpu.pipeline_mode<synchronous>, transform_indices = @transform_2, window_bounds = array<i64: 1, 128>}, {pipeline_mode = #tpu.pipeline_mode<synchronous>, transform_indices = @transform_3, window_bounds = array<i64: 1, 128>}, {transform_indices = @transform_4, window_bounds = array<i64: 128, 128>}, {pipeline_mode = #tpu.pipeline_mode<synchronous>, transform_indices = @transform_5, window_bounds = array<i64: 1, 128>}, {pipeline_mode = #tpu.pipeline_mode<synchronous>, transform_indices = @transform_6, window_bounds = array<i64: 1, 128>}]} {
    %c0_i32 = arith.constant 0 : i32
    %0 = arith.cmpi eq, %arg0, %c0_i32 : i32
    %1 = arith.extui %0 : i1 to i32
    %c0_i32_0 = arith.constant 0 : i32
    %2 = arith.cmpi ne, %1, %c0_i32_0 : i32
    scf.if %2 {
      %cst_18 = arith.constant 0.000000e+00 : f32
      %21 = vector.broadcast %cst_18 : f32 to vector<1x128xf32>
      %c0_19 = arith.constant 0 : index
      %c0_20 = arith.constant 0 : index
      %22 = vector.load %arg8[%c0_19, %c0_20] : memref<1x128xf32, #tpu.memory_space<vmem>>, vector<1x128xf32>
      tpu.vector_store %arg8[%c0_19, %c0_20], %21 {strides = array<i32>} : memref<1x128xf32, #tpu.memory_space<vmem>>, vector<1x128xf32>,
      %cst_21 = arith.constant 0.000000e+00 : f32
      %23 = vector.broadcast %cst_21 : f32 to vector<1x128xf32>
      %c0_22 = arith.constant 0 : index
      %c0_23 = arith.constant 0 : index
      %24 = vector.load %arg9[%c0_22, %c0_23] : memref<1x128xf32, #tpu.memory_space<vmem>>, vector<1x128xf32>
      tpu.vector_store %arg9[%c0_22, %c0_23], %23 {strides = array<i32>} : memref<1x128xf32, #tpu.memory_space<vmem>>, vector<1x128xf32>,
    } else {
    }
    %c0 = arith.constant 0 : index
    %c0_1 = arith.constant 0 : index
    %3 = vector.load %arg1[%c0, %c0_1] : memref<128x40xbf16, #tpu.memory_space<vmem>>, vector<128x40xbf16>
    %c0_2 = arith.constant 0 : index
    %c0_3 = arith.constant 0 : index
    %4 = vector.load %arg2[%c0_2, %c0_3] : memref<40x128xbf16, #tpu.memory_space<vmem>>, vector<40x128xbf16>
    %cst = arith.constant dense<0.000000e+00> : vector<128x128xf32>
    %5 = tpu.matmul %3, %4, %cst {dimension_numbers = #tpu.dot_dimension_numbers<[1], [0], [0], [1], [0, 0, 1, 1], [], []>} : vector<128x40xbf16>, vector<40x128xbf16>, vector<128x128xf32> -> vector<128x128xf32>
    %c0_4 = arith.constant 0 : index
    %c0_5 = arith.constant 0 : index
    %6 = vector.load %arg5[%c0_4, %c0_5] : memref<128x128xf32, #tpu.memory_space<vmem>>, vector<128x128xf32>
    tpu.vector_store %arg5[%c0_4, %c0_5], %5 {strides = array<i32>} : memref<128x128xf32, #tpu.memory_space<vmem>>, vector<128x128xf32>,
    %c0_6 = arith.constant 0 : index
    %c0_7 = arith.constant 0 : index
    %7 = vector.load %arg8[%c0_6, %c0_7] : memref<1x128xf32, #tpu.memory_space<vmem>>, vector<1x128xf32>
    %cst_8 = arith.constant dense<0.000000e+00> : vector<128xf32>
    %8 = vector.multi_reduction <add>, %5, %cst_8 [0] : vector<128x128xf32> to vector<128xf32>
    %9 = vector.shape_cast %8 : vector<128xf32> to vector<1x128xf32>
    %10 = arith.addf %7, %9 : vector<1x128xf32>
    %c0_9 = arith.constant 0 : index
    %c0_10 = arith.constant 0 : index
    %11 = vector.load %arg8[%c0_9, %c0_10] : memref<1x128xf32, #tpu.memory_space<vmem>>, vector<1x128xf32>
    tpu.vector_store %arg8[%c0_9, %c0_10], %10 {strides = array<i32>} : memref<1x128xf32, #tpu.memory_space<vmem>>, vector<1x128xf32>,
    %c0_11 = arith.constant 0 : index
    %c0_12 = arith.constant 0 : index
    %12 = vector.load %arg9[%c0_11, %c0_12] : memref<1x128xf32, #tpu.memory_space<vmem>>, vector<1x128xf32>
    %13 = arith.mulf %5, %5 : vector<128x128xf32>
    %cst_13 = arith.constant dense<0.000000e+00> : vector<128xf32>
    %14 = vector.multi_reduction <add>, %13, %cst_13 [0] : vector<128x128xf32> to vector<128xf32>
    %15 = vector.shape_cast %14 : vector<128xf32> to vector<1x128xf32>
    %16 = arith.addf %12, %15 : vector<1x128xf32>
    %c0_14 = arith.constant 0 : index
    %c0_15 = arith.constant 0 : index
    %17 = vector.load %arg9[%c0_14, %c0_15] : memref<1x128xf32, #tpu.memory_space<vmem>>, vector<1x128xf32>
    tpu.vector_store %arg9[%c0_14, %c0_15], %16 {strides = array<i32>} : memref<1x128xf32, #tpu.memory_space<vmem>>, vector<1x128xf32>,
    %c0_i32_16 = arith.constant 0 : i32
    %18 = arith.cmpi eq, %arg0, %c0_i32_16 : i32
    %19 = arith.extui %18 : i1 to i32
    %c0_i32_17 = arith.constant 0 : i32
    %20 = arith.cmpi ne, %19, %c0_i32_17 : i32
    scf.if %20 {
      %c0_18 = arith.constant 0 : index
      %c0_19 = arith.constant 0 : index
      %21 = vector.load %arg8[%c0_18, %c0_19] : memref<1x128xf32, #tpu.memory_space<vmem>>, vector<1x128xf32>
      %cst_20 = arith.constant 7.812500e-03 : f32
      %22 = vector.broadcast %cst_20 : f32 to vector<1x128xf32>
      %23 = arith.mulf %21, %22 : vector<1x128xf32>
      %c0_21 = arith.constant 0 : index
      %c0_22 = arith.constant 0 : index
      %24 = vector.load %arg9[%c0_21, %c0_22] : memref<1x128xf32, #tpu.memory_space<vmem>>, vector<1x128xf32>
      %cst_23 = arith.constant 7.812500e-03 : f32
      %25 = vector.broadcast %cst_23 : f32 to vector<1x128xf32>
      %26 = arith.mulf %24, %25 : vector<1x128xf32>
      %27 = arith.mulf %23, %23 : vector<1x128xf32>
      %28 = arith.subf %26, %27 : vector<1x128xf32>
      %cst_24 = arith.constant 0.000000e+00 : f32
      %29 = vector.broadcast %cst_24 : f32 to vector<1x128xf32>
      %30 = arith.maximumf %28, %29 : vector<1x128xf32>
      %c0_25 = arith.constant 0 : index
      %c0_26 = arith.constant 0 : index
      %31 = vector.load %arg3[%c0_25, %c0_26] : memref<1x128xf32, #tpu.memory_space<vmem>>, vector<1x128xf32>
      %cst_27 = arith.constant 9.99999974E-6 : f32
      %32 = vector.broadcast %cst_27 : f32 to vector<1x128xf32>
      %33 = arith.addf %30, %32 : vector<1x128xf32>
      %34 = math.rsqrt %33 : vector<1x128xf32>
      %35 = arith.mulf %31, %34 : vector<1x128xf32>
      %c0_28 = arith.constant 0 : index
      %c0_29 = arith.constant 0 : index
      %36 = vector.load %arg6[%c0_28, %c0_29] : memref<1x128xf32, #tpu.memory_space<vmem>>, vector<1x128xf32>
      tpu.vector_store %arg6[%c0_28, %c0_29], %35 {strides = array<i32>} : memref<1x128xf32, #tpu.memory_space<vmem>>, vector<1x128xf32>,
      %c0_30 = arith.constant 0 : index
      %c0_31 = arith.constant 0 : index
      %37 = vector.load %arg4[%c0_30, %c0_31] : memref<1x128xf32, #tpu.memory_space<vmem>>, vector<1x128xf32>
      %38 = arith.mulf %23, %35 : vector<1x128xf32>
      %39 = arith.subf %37, %38 : vector<1x128xf32>
      %c0_32 = arith.constant 0 : index
      %c0_33 = arith.constant 0 : index
      %40 = vector.load %arg7[%c0_32, %c0_33] : memref<1x128xf32, #tpu.memory_space<vmem>>, vector<1x128xf32>
      tpu.vector_store %arg7[%c0_32, %c0_33], %39 {strides = array<i32>} : memref<1x128xf32, #tpu.memory_space<vmem>>, vector<1x128xf32>,
    } else {
    }
    return
  }
  func.func @transform_0(%arg0: i32) -> (i32, i32) {
    %c0_i32 = arith.constant 0 : i32
    %c0_i32_0 = arith.constant 0 : i32
    return %arg0, %c0_i32 : i32, i32
  }
  func.func @transform_1(%arg0: i32) -> (i32, i32) {
    %c0_i32 = arith.constant 0 : i32
    %c0_i32_0 = arith.constant 0 : i32
    %c0_i32_1 = arith.constant 0 : i32
    return %c0_i32, %c0_i32_0 : i32, i32
  }
  func.func @transform_2(%arg0: i32) -> (i32, i32) {
    %c0_i32 = arith.constant 0 : i32
    %c0_i32_0 = arith.constant 0 : i32
    %c0_i32_1 = arith.constant 0 : i32
    return %c0_i32, %c0_i32_0 : i32, i32
  }
  func.func @transform_3(%arg0: i32) -> (i32, i32) {
    %c0_i32 = arith.constant 0 : i32
    %c0_i32_0 = arith.constant 0 : i32
    %c0_i32_1 = arith.constant 0 : i32
    return %c0_i32, %c0_i32_0 : i32, i32
  }
  func.func @transform_4(%arg0: i32) -> (i32, i32) {
    %c0_i32 = arith.constant 0 : i32
    %c0_i32_0 = arith.constant 0 : i32
    return %arg0, %c0_i32 : i32, i32
  }
  func.func @transform_5(%arg0: i32) -> (i32, i32) {
    %c0_i32 = arith.constant 0 : i32
    %c0_i32_0 = arith.constant 0 : i32
    %c0_i32_1 = arith.constant 0 : i32
    return %c0_i32, %c0_i32_0 : i32, i32
  }
  func.func @transform_6(%arg0: i32) -> (i32, i32) {
    %c0_i32 = arith.constant 0 : i32
    %c0_i32_0 = arith.constant 0 : i32
    %c0_i32_1 = arith.constant 0 : i32
    return %c0_i32, %c0_i32_0 : i32, i32
  }
}

module attributes {stable_mosaic.version = 11 : i64} {
  func.func @bn_act_kernel(%arg0: i32, %arg1: memref<128x128xf32, #tpu.memory_space<vmem>>, %arg2: memref<1x128xf32, #tpu.memory_space<vmem>>, %arg3: memref<1x128xf32, #tpu.memory_space<vmem>>, %arg4: memref<128x128xbf16, #tpu.memory_space<vmem>>) attributes {dimension_semantics = [#tpu.dimension_semantics<parallel>], iteration_bounds = array<i64: 1>, scalar_prefetch = 0 : i64, scratch_operands = 0 : i64, tpu.core_type = #tpu.core_type<tc>, window_params = [{transform_indices = @transform_0, window_bounds = array<i64: 128, 128>}, {pipeline_mode = #tpu.pipeline_mode<synchronous>, transform_indices = @transform_1, window_bounds = array<i64: 1, 128>}, {pipeline_mode = #tpu.pipeline_mode<synchronous>, transform_indices = @transform_2, window_bounds = array<i64: 1, 128>}, {transform_indices = @transform_3, window_bounds = array<i64: 128, 128>}]} {
    %c0 = arith.constant 0 : index
    %c0_0 = arith.constant 0 : index
    %0 = vector.load %arg1[%c0, %c0_0] : memref<128x128xf32, #tpu.memory_space<vmem>>, vector<128x128xf32>
    %c0_1 = arith.constant 0 : index
    %c0_2 = arith.constant 0 : index
    %1 = vector.load %arg2[%c0_1, %c0_2] : memref<1x128xf32, #tpu.memory_space<vmem>>, vector<1x128xf32>
    %2 = vector.broadcast %1 : vector<1x128xf32> to vector<128x128xf32>
    %3 = arith.mulf %0, %2 : vector<128x128xf32>
    %c0_3 = arith.constant 0 : index
    %c0_4 = arith.constant 0 : index
    %4 = vector.load %arg3[%c0_3, %c0_4] : memref<1x128xf32, #tpu.memory_space<vmem>>, vector<1x128xf32>
    %5 = vector.broadcast %4 : vector<1x128xf32> to vector<128x128xf32>
    %6 = arith.addf %3, %5 : vector<128x128xf32>
    %cst = arith.constant 0.000000e+00 : f32
    %7 = vector.broadcast %cst : f32 to vector<128x128xf32>
    %8 = arith.cmpf oge, %6, %7 : vector<128x128xf32>
    %cst_5 = arith.constant 0.00999999977 : f32
    %9 = vector.broadcast %cst_5 : f32 to vector<128x128xf32>
    %10 = arith.mulf %9, %6 : vector<128x128xf32>
    %11 = arith.select %8, %6, %10 : vector<128x128xi1>, vector<128x128xf32>
    %12 = arith.truncf %11 : vector<128x128xf32> to vector<128x128xbf16>
    %c0_6 = arith.constant 0 : index
    %c0_7 = arith.constant 0 : index
    %13 = vector.load %arg4[%c0_6, %c0_7] : memref<128x128xbf16, #tpu.memory_space<vmem>>, vector<128x128xbf16>
    tpu.vector_store %arg4[%c0_6, %c0_7], %12 {strides = array<i32>} : memref<128x128xbf16, #tpu.memory_space<vmem>>, vector<128x128xbf16>,
    return
  }
  func.func @transform_0(%arg0: i32) -> (i32, i32) {
    %c0_i32 = arith.constant 0 : i32
    %c0_i32_0 = arith.constant 0 : i32
    return %arg0, %c0_i32 : i32, i32
  }
  func.func @transform_1(%arg0: i32) -> (i32, i32) {
    %c0_i32 = arith.constant 0 : i32
    %c0_i32_0 = arith.constant 0 : i32
    %c0_i32_1 = arith.constant 0 : i32
    return %c0_i32, %c0_i32_0 : i32, i32
  }
  func.func @transform_2(%arg0: i32) -> (i32, i32) {
    %c0_i32 = arith.constant 0 : i32
    %c0_i32_0 = arith.constant 0 : i32
    %c0_i32_1 = arith.constant 0 : i32
    return %c0_i32, %c0_i32_0 : i32, i32
  }
  func.func @transform_3(%arg0: i32) -> (i32, i32) {
    %c0_i32 = arith.constant 0 : i32
    %c0_i32_0 = arith.constant 0 : i32
    return %arg0, %c0_i32 : i32, i32
  }
}

module attributes {stable_mosaic.version = 11 : i64} {
  func.func @conv_stats_kernel(%arg0: i32, %arg1: memref<128x72xbf16, #tpu.memory_space<vmem>>, %arg2: memref<72x128xbf16, #tpu.memory_space<vmem>>, %arg3: memref<1x128xf32, #tpu.memory_space<vmem>>, %arg4: memref<1x128xf32, #tpu.memory_space<vmem>>, %arg5: memref<128x128xf32, #tpu.memory_space<vmem>>, %arg6: memref<1x128xf32, #tpu.memory_space<vmem>>, %arg7: memref<1x128xf32, #tpu.memory_space<vmem>>, %arg8: memref<1x128xf32, #tpu.memory_space<vmem>>, %arg9: memref<1x128xf32, #tpu.memory_space<vmem>>) attributes {dimension_semantics = [#tpu.dimension_semantics<arbitrary>], iteration_bounds = array<i64: 1>, scalar_prefetch = 0 : i64, scratch_operands = 2 : i64, tpu.core_type = #tpu.core_type<tc>, window_params = [{transform_indices = @transform_0, window_bounds = array<i64: 128, 72>}, {pipeline_mode = #tpu.pipeline_mode<synchronous>, transform_indices = @transform_1, window_bounds = array<i64: 72, 128>}, {pipeline_mode = #tpu.pipeline_mode<synchronous>, transform_indices = @transform_2, window_bounds = array<i64: 1, 128>}, {pipeline_mode = #tpu.pipeline_mode<synchronous>, transform_indices = @transform_3, window_bounds = array<i64: 1, 128>}, {transform_indices = @transform_4, window_bounds = array<i64: 128, 128>}, {pipeline_mode = #tpu.pipeline_mode<synchronous>, transform_indices = @transform_5, window_bounds = array<i64: 1, 128>}, {pipeline_mode = #tpu.pipeline_mode<synchronous>, transform_indices = @transform_6, window_bounds = array<i64: 1, 128>}]} {
    %c0_i32 = arith.constant 0 : i32
    %0 = arith.cmpi eq, %arg0, %c0_i32 : i32
    %1 = arith.extui %0 : i1 to i32
    %c0_i32_0 = arith.constant 0 : i32
    %2 = arith.cmpi ne, %1, %c0_i32_0 : i32
    scf.if %2 {
      %cst_18 = arith.constant 0.000000e+00 : f32
      %21 = vector.broadcast %cst_18 : f32 to vector<1x128xf32>
      %c0_19 = arith.constant 0 : index
      %c0_20 = arith.constant 0 : index
      %22 = vector.load %arg8[%c0_19, %c0_20] : memref<1x128xf32, #tpu.memory_space<vmem>>, vector<1x128xf32>
      tpu.vector_store %arg8[%c0_19, %c0_20], %21 {strides = array<i32>} : memref<1x128xf32, #tpu.memory_space<vmem>>, vector<1x128xf32>,
      %cst_21 = arith.constant 0.000000e+00 : f32
      %23 = vector.broadcast %cst_21 : f32 to vector<1x128xf32>
      %c0_22 = arith.constant 0 : index
      %c0_23 = arith.constant 0 : index
      %24 = vector.load %arg9[%c0_22, %c0_23] : memref<1x128xf32, #tpu.memory_space<vmem>>, vector<1x128xf32>
      tpu.vector_store %arg9[%c0_22, %c0_23], %23 {strides = array<i32>} : memref<1x128xf32, #tpu.memory_space<vmem>>, vector<1x128xf32>,
    } else {
    }
    %c0 = arith.constant 0 : index
    %c0_1 = arith.constant 0 : index
    %3 = vector.load %arg1[%c0, %c0_1] : memref<128x72xbf16, #tpu.memory_space<vmem>>, vector<128x72xbf16>
    %c0_2 = arith.constant 0 : index
    %c0_3 = arith.constant 0 : index
    %4 = vector.load %arg2[%c0_2, %c0_3] : memref<72x128xbf16, #tpu.memory_space<vmem>>, vector<72x128xbf16>
    %cst = arith.constant dense<0.000000e+00> : vector<128x128xf32>
    %5 = tpu.matmul %3, %4, %cst {dimension_numbers = #tpu.dot_dimension_numbers<[1], [0], [0], [1], [0, 0, 1, 1], [], []>} : vector<128x72xbf16>, vector<72x128xbf16>, vector<128x128xf32> -> vector<128x128xf32>
    %c0_4 = arith.constant 0 : index
    %c0_5 = arith.constant 0 : index
    %6 = vector.load %arg5[%c0_4, %c0_5] : memref<128x128xf32, #tpu.memory_space<vmem>>, vector<128x128xf32>
    tpu.vector_store %arg5[%c0_4, %c0_5], %5 {strides = array<i32>} : memref<128x128xf32, #tpu.memory_space<vmem>>, vector<128x128xf32>,
    %c0_6 = arith.constant 0 : index
    %c0_7 = arith.constant 0 : index
    %7 = vector.load %arg8[%c0_6, %c0_7] : memref<1x128xf32, #tpu.memory_space<vmem>>, vector<1x128xf32>
    %cst_8 = arith.constant dense<0.000000e+00> : vector<128xf32>
    %8 = vector.multi_reduction <add>, %5, %cst_8 [0] : vector<128x128xf32> to vector<128xf32>
    %9 = vector.shape_cast %8 : vector<128xf32> to vector<1x128xf32>
    %10 = arith.addf %7, %9 : vector<1x128xf32>
    %c0_9 = arith.constant 0 : index
    %c0_10 = arith.constant 0 : index
    %11 = vector.load %arg8[%c0_9, %c0_10] : memref<1x128xf32, #tpu.memory_space<vmem>>, vector<1x128xf32>
    tpu.vector_store %arg8[%c0_9, %c0_10], %10 {strides = array<i32>} : memref<1x128xf32, #tpu.memory_space<vmem>>, vector<1x128xf32>,
    %c0_11 = arith.constant 0 : index
    %c0_12 = arith.constant 0 : index
    %12 = vector.load %arg9[%c0_11, %c0_12] : memref<1x128xf32, #tpu.memory_space<vmem>>, vector<1x128xf32>
    %13 = arith.mulf %5, %5 : vector<128x128xf32>
    %cst_13 = arith.constant dense<0.000000e+00> : vector<128xf32>
    %14 = vector.multi_reduction <add>, %13, %cst_13 [0] : vector<128x128xf32> to vector<128xf32>
    %15 = vector.shape_cast %14 : vector<128xf32> to vector<1x128xf32>
    %16 = arith.addf %12, %15 : vector<1x128xf32>
    %c0_14 = arith.constant 0 : index
    %c0_15 = arith.constant 0 : index
    %17 = vector.load %arg9[%c0_14, %c0_15] : memref<1x128xf32, #tpu.memory_space<vmem>>, vector<1x128xf32>
    tpu.vector_store %arg9[%c0_14, %c0_15], %16 {strides = array<i32>} : memref<1x128xf32, #tpu.memory_space<vmem>>, vector<1x128xf32>,
    %c0_i32_16 = arith.constant 0 : i32
    %18 = arith.cmpi eq, %arg0, %c0_i32_16 : i32
    %19 = arith.extui %18 : i1 to i32
    %c0_i32_17 = arith.constant 0 : i32
    %20 = arith.cmpi ne, %19, %c0_i32_17 : i32
    scf.if %20 {
      %c0_18 = arith.constant 0 : index
      %c0_19 = arith.constant 0 : index
      %21 = vector.load %arg8[%c0_18, %c0_19] : memref<1x128xf32, #tpu.memory_space<vmem>>, vector<1x128xf32>
      %cst_20 = arith.constant 7.812500e-03 : f32
      %22 = vector.broadcast %cst_20 : f32 to vector<1x128xf32>
      %23 = arith.mulf %21, %22 : vector<1x128xf32>
      %c0_21 = arith.constant 0 : index
      %c0_22 = arith.constant 0 : index
      %24 = vector.load %arg9[%c0_21, %c0_22] : memref<1x128xf32, #tpu.memory_space<vmem>>, vector<1x128xf32>
      %cst_23 = arith.constant 7.812500e-03 : f32
      %25 = vector.broadcast %cst_23 : f32 to vector<1x128xf32>
      %26 = arith.mulf %24, %25 : vector<1x128xf32>
      %27 = arith.mulf %23, %23 : vector<1x128xf32>
      %28 = arith.subf %26, %27 : vector<1x128xf32>
      %cst_24 = arith.constant 0.000000e+00 : f32
      %29 = vector.broadcast %cst_24 : f32 to vector<1x128xf32>
      %30 = arith.maximumf %28, %29 : vector<1x128xf32>
      %c0_25 = arith.constant 0 : index
      %c0_26 = arith.constant 0 : index
      %31 = vector.load %arg3[%c0_25, %c0_26] : memref<1x128xf32, #tpu.memory_space<vmem>>, vector<1x128xf32>
      %cst_27 = arith.constant 9.99999974E-6 : f32
      %32 = vector.broadcast %cst_27 : f32 to vector<1x128xf32>
      %33 = arith.addf %30, %32 : vector<1x128xf32>
      %34 = math.rsqrt %33 : vector<1x128xf32>
      %35 = arith.mulf %31, %34 : vector<1x128xf32>
      %c0_28 = arith.constant 0 : index
      %c0_29 = arith.constant 0 : index
      %36 = vector.load %arg6[%c0_28, %c0_29] : memref<1x128xf32, #tpu.memory_space<vmem>>, vector<1x128xf32>
      tpu.vector_store %arg6[%c0_28, %c0_29], %35 {strides = array<i32>} : memref<1x128xf32, #tpu.memory_space<vmem>>, vector<1x128xf32>,
      %c0_30 = arith.constant 0 : index
      %c0_31 = arith.constant 0 : index
      %37 = vector.load %arg4[%c0_30, %c0_31] : memref<1x128xf32, #tpu.memory_space<vmem>>, vector<1x128xf32>
      %38 = arith.mulf %23, %35 : vector<1x128xf32>
      %39 = arith.subf %37, %38 : vector<1x128xf32>
      %c0_32 = arith.constant 0 : index
      %c0_33 = arith.constant 0 : index
      %40 = vector.load %arg7[%c0_32, %c0_33] : memref<1x128xf32, #tpu.memory_space<vmem>>, vector<1x128xf32>
      tpu.vector_store %arg7[%c0_32, %c0_33], %39 {strides = array<i32>} : memref<1x128xf32, #tpu.memory_space<vmem>>, vector<1x128xf32>,
    } else {
    }
    return
  }
  func.func @transform_0(%arg0: i32) -> (i32, i32) {
    %c0_i32 = arith.constant 0 : i32
    %c0_i32_0 = arith.constant 0 : i32
    return %arg0, %c0_i32 : i32, i32
  }
  func.func @transform_1(%arg0: i32) -> (i32, i32) {
    %c0_i32 = arith.constant 0 : i32
    %c0_i32_0 = arith.constant 0 : i32
    %c0_i32_1 = arith.constant 0 : i32
    return %c0_i32, %c0_i32_0 : i32, i32
  }
  func.func @transform_2(%arg0: i32) -> (i32, i32) {
    %c0_i32 = arith.constant 0 : i32
    %c0_i32_0 = arith.constant 0 : i32
    %c0_i32_1 = arith.constant 0 : i32
    return %c0_i32, %c0_i32_0 : i32, i32
  }
  func.func @transform_3(%arg0: i32) -> (i32, i32) {
    %c0_i32 = arith.constant 0 : i32
    %c0_i32_0 = arith.constant 0 : i32
    %c0_i32_1 = arith.constant 0 : i32
    return %c0_i32, %c0_i32_0 : i32, i32
  }
  func.func @transform_4(%arg0: i32) -> (i32, i32) {
    %c0_i32 = arith.constant 0 : i32
    %c0_i32_0 = arith.constant 0 : i32
    return %arg0, %c0_i32 : i32, i32
  }
  func.func @transform_5(%arg0: i32) -> (i32, i32) {
    %c0_i32 = arith.constant 0 : i32
    %c0_i32_0 = arith.constant 0 : i32
    %c0_i32_1 = arith.constant 0 : i32
    return %c0_i32, %c0_i32_0 : i32, i32
  }
  func.func @transform_6(%arg0: i32) -> (i32, i32) {
    %c0_i32 = arith.constant 0 : i32
    %c0_i32_0 = arith.constant 0 : i32
    %c0_i32_1 = arith.constant 0 : i32
    return %c0_i32, %c0_i32_0 : i32, i32
  }
}

module attributes {stable_mosaic.version = 11 : i64} {
  func.func @bn_add_act_kernel(%arg0: i32, %arg1: memref<128x128xf32, #tpu.memory_space<vmem>>, %arg2: memref<1x128xf32, #tpu.memory_space<vmem>>, %arg3: memref<1x128xf32, #tpu.memory_space<vmem>>, %arg4: memref<128x128xbf16, #tpu.memory_space<vmem>>, %arg5: memref<128x128xf32, #tpu.memory_space<vmem>>) attributes {dimension_semantics = [#tpu.dimension_semantics<parallel>], iteration_bounds = array<i64: 1>, scalar_prefetch = 0 : i64, scratch_operands = 0 : i64, tpu.core_type = #tpu.core_type<tc>, window_params = [{transform_indices = @transform_0, window_bounds = array<i64: 128, 128>}, {pipeline_mode = #tpu.pipeline_mode<synchronous>, transform_indices = @transform_1, window_bounds = array<i64: 1, 128>}, {pipeline_mode = #tpu.pipeline_mode<synchronous>, transform_indices = @transform_2, window_bounds = array<i64: 1, 128>}, {transform_indices = @transform_3, window_bounds = array<i64: 128, 128>}, {transform_indices = @transform_4, window_bounds = array<i64: 128, 128>}]} {
    %c0 = arith.constant 0 : index
    %c0_0 = arith.constant 0 : index
    %0 = vector.load %arg1[%c0, %c0_0] : memref<128x128xf32, #tpu.memory_space<vmem>>, vector<128x128xf32>
    %c0_1 = arith.constant 0 : index
    %c0_2 = arith.constant 0 : index
    %1 = vector.load %arg2[%c0_1, %c0_2] : memref<1x128xf32, #tpu.memory_space<vmem>>, vector<1x128xf32>
    %2 = vector.broadcast %1 : vector<1x128xf32> to vector<128x128xf32>
    %3 = arith.mulf %0, %2 : vector<128x128xf32>
    %c0_3 = arith.constant 0 : index
    %c0_4 = arith.constant 0 : index
    %4 = vector.load %arg3[%c0_3, %c0_4] : memref<1x128xf32, #tpu.memory_space<vmem>>, vector<1x128xf32>
    %5 = vector.broadcast %4 : vector<1x128xf32> to vector<128x128xf32>
    %6 = arith.addf %3, %5 : vector<128x128xf32>
    %c0_5 = arith.constant 0 : index
    %c0_6 = arith.constant 0 : index
    %7 = vector.load %arg4[%c0_5, %c0_6] : memref<128x128xbf16, #tpu.memory_space<vmem>>, vector<128x128xbf16>
    %8 = arith.extf %7 : vector<128x128xbf16> to vector<128x128xf32>
    %9 = arith.addf %6, %8 : vector<128x128xf32>
    %cst = arith.constant 0.000000e+00 : f32
    %10 = vector.broadcast %cst : f32 to vector<128x128xf32>
    %11 = arith.cmpf oge, %9, %10 : vector<128x128xf32>
    %cst_7 = arith.constant 0.00999999977 : f32
    %12 = vector.broadcast %cst_7 : f32 to vector<128x128xf32>
    %13 = arith.mulf %12, %9 : vector<128x128xf32>
    %14 = arith.select %11, %9, %13 : vector<128x128xi1>, vector<128x128xf32>
    %c0_8 = arith.constant 0 : index
    %c0_9 = arith.constant 0 : index
    %15 = vector.load %arg5[%c0_8, %c0_9] : memref<128x128xf32, #tpu.memory_space<vmem>>, vector<128x128xf32>
    tpu.vector_store %arg5[%c0_8, %c0_9], %14 {strides = array<i32>} : memref<128x128xf32, #tpu.memory_space<vmem>>, vector<128x128xf32>,
    return
  }
  func.func @transform_0(%arg0: i32) -> (i32, i32) {
    %c0_i32 = arith.constant 0 : i32
    %c0_i32_0 = arith.constant 0 : i32
    return %arg0, %c0_i32 : i32, i32
  }
  func.func @transform_1(%arg0: i32) -> (i32, i32) {
    %c0_i32 = arith.constant 0 : i32
    %c0_i32_0 = arith.constant 0 : i32
    %c0_i32_1 = arith.constant 0 : i32
    return %c0_i32, %c0_i32_0 : i32, i32
  }
  func.func @transform_2(%arg0: i32) -> (i32, i32) {
    %c0_i32 = arith.constant 0 : i32
    %c0_i32_0 = arith.constant 0 : i32
    %c0_i32_1 = arith.constant 0 : i32
    return %c0_i32, %c0_i32_0 : i32, i32
  }
  func.func @transform_3(%arg0: i32) -> (i32, i32) {
    %c0_i32 = arith.constant 0 : i32
    %c0_i32_0 = arith.constant 0 : i32
    return %arg0, %c0_i32 : i32, i32
  }
  func.func @transform_4(%arg0: i32) -> (i32, i32) {
    %c0_i32 = arith.constant 0 : i32
    %c0_i32_0 = arith.constant 0 : i32
    return %arg0, %c0_i32 : i32, i32
  }
}

</mosaic_0001>

<llo_original>
// kernel: basic_block_forward.5
$region0: #{basic_block_forward.5}
  #allocation0 [shape = 'u32[]', space=smem, size = 0x4, offset = 0x4, fixed_abs, tag = 'smem constant byte address 0x4 - core index']
  #allocation1 [shape = 'u32[144,128]{1,0:T(1,128)}', space=vmem, size = 0x12000, scoped, tag = 'internal scratch']
  %s0 = inlined_call_operand.vmem [shape: f32[128,128], index: 0, kind: input, shape index: {}]
  %s1 = inlined_call_operand.vmem [shape: f32[1,128], index: 1, kind: input, shape index: {}]
  %s2 = inlined_call_operand.vmem [shape: f32[1,128], index: 2, kind: input, shape index: {}]
  %s3 = inlined_call_operand.vmem [shape: bf16[128,128], index: 3, kind: output, shape index: {}]
  %s4 = sld [smem:[#allocation0]]
  $region22: #{basic_block_forward.5} parent=0
    _
  %s6 = ssub.s32 1, %s4
  %s7 = scalar_select 0, %s6, %s4
  // Predicated region
  $region2: #{basic_block_forward.5} parent=0 // pred_check
    _
  $region3: #{basic_block_forward.5} parent=0 // pred_check_branch
    %9 = sbr.rel (0) target = $region5
  $region4: #{basic_block_forward.5} parent=0 // pred_region
    _
  $region5: #{basic_block_forward.5} parent=0 // pred_fallthru
    _
  // Predicated region
  $region6: #{basic_block_forward.5} parent=0 // pred_check
    _
  $region7: #{basic_block_forward.5} parent=0 // pred_check_branch
    %11 = sbr.rel (0) target = $region9
  $region8: #{basic_block_forward.5} parent=0 // pred_region
    _
  $region9: #{basic_block_forward.5} parent=0 // pred_fallthru
    _
  // Predicated region
  $region10: #{basic_block_forward.5} parent=0 // pred_check
    _
  $region11: #{basic_block_forward.5} parent=0 // pred_check_branch
    %13 = sbr.rel (0) target = $region13
  $region12: #{basic_block_forward.5} parent=0 // pred_region
    _
  $region13: #{basic_block_forward.5} parent=0 // pred_fallthru
    _
  %v14 = vld [vmem:[%s0] sm:$0xff]
  %v15 = vld [vmem:[%s0 + $0x8] sm:$0xff]
  %v16 = vld [vmem:[%s0 + $0x10] sm:$0xff]
  %v17 = vld [vmem:[%s0 + $0x18] sm:$0xff]
  %v18 = vld [vmem:[%s0 + $0x20] sm:$0xff]
  %v19 = vld [vmem:[%s0 + $0x28] sm:$0xff]
  %v20 = vld [vmem:[%s0 + $0x30] sm:$0xff]
  %v21 = vld [vmem:[%s0 + $0x38] sm:$0xff]
  %v22 = vld [vmem:[%s0 + $0x40] sm:$0xff]
  %v23 = vld [vmem:[%s0 + $0x48] sm:$0xff]
  %v24 = vld [vmem:[%s0 + $0x50] sm:$0xff]
  %v25 = vld [vmem:[%s0 + $0x58] sm:$0xff]
  %v26 = vld [vmem:[%s0 + $0x60] sm:$0xff]
  %v27 = vld [vmem:[%s0 + $0x68] sm:$0xff]
  %v28 = vld [vmem:[%s0 + $0x70] sm:$0xff]
  %v29 = vld [vmem:[%s0 + $0x78] sm:$0xff]
  %v30 = vld [vmem:[%s1] sm:$0x1]
  %v32 = vlaneseq
  %v33 = vshrl.u32 %v32, 7
  %v34 = vsub.s32 0, %v33
  %v35 = vrot.slane %v30, %v34
  %v37 = vmul.f32 %v14, %v35
  %v38 = vmul.f32 %v15, %v35
  %v39 = vmul.f32 %v16, %v35
  %v40 = vmul.f32 %v17, %v35
  %v41 = vmul.f32 %v18, %v35
  %v42 = vmul.f32 %v19, %v35
  %v43 = vmul.f32 %v20, %v35
  %v44 = vmul.f32 %v21, %v35
  %v45 = vmul.f32 %v22, %v35
  %v46 = vmul.f32 %v23, %v35
  %v47 = vmul.f32 %v24, %v35
  %v48 = vmul.f32 %v25, %v35
  %v49 = vmul.f32 %v26, %v35
  %v50 = vmul.f32 %v27, %v35
  %v51 = vmul.f32 %v28, %v35
  %v52 = vmul.f32 %v29, %v35
  %v53 = vld [vmem:[%s2] sm:$0x1]
  %v55 = vlaneseq
  %v56 = vshrl.u32 %v55, 7
  %v57 = vsub.s32 0, %v56
  %v58 = vrot.slane %v53, %v57
  %v60 = vadd.f32 %v37, %v58
  %v61 = vadd.f32 %v38, %v58
  %v62 = vadd.f32 %v39, %v58
  %v63 = vadd.f32 %v40, %v58
  %v64 = vadd.f32 %v41, %v58
  %v65 = vadd.f32 %v42, %v58
  %v66 = vadd.f32 %v43, %v58
  %v67 = vadd.f32 %v44, %v58
  %v68 = vadd.f32 %v45, %v58
  %v69 = vadd.f32 %v46, %v58
  %v70 = vadd.f32 %v47, %v58
  %v71 = vadd.f32 %v48, %v58
  %v72 = vadd.f32 %v49, %v58
  %v73 = vadd.f32 %v50, %v58
  %v74 = vadd.f32 %v51, %v58
  %v75 = vadd.f32 %v52, %v58
  %vm76 = vcmp.ge.f32.partialorder %v60, 0.0
  %vm77 = vcmp.ge.f32.partialorder %v61, 0.0
  %vm78 = vcmp.ge.f32.partialorder %v62, 0.0
  %vm79 = vcmp.ge.f32.partialorder %v63, 0.0
  %vm80 = vcmp.ge.f32.partialorder %v64, 0.0
  %vm81 = vcmp.ge.f32.partialorder %v65, 0.0
  %vm82 = vcmp.ge.f32.partialorder %v66, 0.0
  %vm83 = vcmp.ge.f32.partialorder %v67, 0.0
  %vm84 = vcmp.ge.f32.partialorder %v68, 0.0
  %vm85 = vcmp.ge.f32.partialorder %v69, 0.0
  %vm86 = vcmp.ge.f32.partialorder %v70, 0.0
  %vm87 = vcmp.ge.f32.partialorder %v71, 0.0
  %vm88 = vcmp.ge.f32.partialorder %v72, 0.0
  %vm89 = vcmp.ge.f32.partialorder %v73, 0.0
  %vm90 = vcmp.ge.f32.partialorder %v74, 0.0
  %vm91 = vcmp.ge.f32.partialorder %v75, 0.0
  %v92 = vmul.f32 %v60, 0.01
  %v93 = vmul.f32 %v61, 0.01
  %v94 = vmul.f32 %v62, 0.01
  %v95 = vmul.f32 %v63, 0.01
  %v96 = vmul.f32 %v64, 0.01
  %v97 = vmul.f32 %v65, 0.01
  %v98 = vmul.f32 %v66, 0.01
  %v99 = vmul.f32 %v67, 0.01
  %v100 = vmul.f32 %v68, 0.01
  %v101 = vmul.f32 %v69, 0.01
  %v102 = vmul.f32 %v70, 0.01
  %v103 = vmul.f32 %v71, 0.01
  %v104 = vmul.f32 %v72, 0.01
  %v105 = vmul.f32 %v73, 0.01
  %v106 = vmul.f32 %v74, 0.01
  %v107 = vmul.f32 %v75, 0.01
  %v108 = vsel %vm76, %v60, %v92
  %v109 = vsel %vm77, %v61, %v93
  %v110 = vsel %vm78, %v62, %v94
  %v111 = vsel %vm79, %v63, %v95
  %v112 = vsel %vm80, %v64, %v96
  %v113 = vsel %vm81, %v65, %v97
  %v114 = vsel %vm82, %v66, %v98
  %v115 = vsel %vm83, %v67, %v99
  %v116 = vsel %vm84, %v68, %v100
  %v117 = vsel %vm85, %v69, %v101
  %v118 = vsel %vm86, %v70, %v102
  %v119 = vsel %vm87, %v71, %v103
  %v120 = vsel %vm88, %v72, %v104
  %v121 = vsel %vm89, %v73, %v105
  %v122 = vsel %vm90, %v74, %v106
  %v123 = vsel %vm91, %v75, %v107
  %v124 = vpack.c.bf16 %v109, %v108
  %v125 = vpack.c.bf16 %v111, %v110
  %v126 = vpack.c.bf16 %v113, %v112
  %v127 = vpack.c.bf16 %v115, %v114
  %v128 = vpack.c.bf16 %v117, %v116
  %v129 = vpack.c.bf16 %v119, %v118
  %v130 = vpack.c.bf16 %v121, %v120
  %v131 = vpack.c.bf16 %v123, %v122
  %v140 = vunpack.c.l.b16 %v124
  %v141 = vunpack.c.h.b16 %v124
  %v142 = vunpack.c.l.b16 %v125
  %v143 = vunpack.c.h.b16 %v125
  %v144 = vunpack.c.l.b16 %v126
  %v145 = vunpack.c.h.b16 %v126
  %v146 = vunpack.c.l.b16 %v127
  %v147 = vunpack.c.h.b16 %v127
  %v148 = vunpack.c.l.b16 %v128
  %v149 = vunpack.c.h.b16 %v128
  %v150 = vunpack.c.l.b16 %v129
  %v151 = vunpack.c.h.b16 %v129
  %v152 = vunpack.c.l.b16 %v130
  %v153 = vunpack.c.h.b16 %v130
  %v154 = vunpack.c.l.b16 %v131
  %v155 = vunpack.c.h.b16 %v131
  %v156 = vpack.c.b16 %v140, %v140
  %v157 = vpack.c.b16 %v141, %v141
  %v158 = vpack.c.b16 %v142, %v142
  %v159 = vpack.c.b16 %v143, %v143
  %v160 = vpack.c.b16 %v144, %v144
  %v161 = vpack.c.b16 %v145, %v145
  %v162 = vpack.c.b16 %v146, %v146
  %v163 = vpack.c.b16 %v147, %v147
  %v164 = vpack.c.b16 %v148, %v148
  %v165 = vpack.c.b16 %v149, %v149
  %v166 = vpack.c.b16 %v150, %v150
  %v167 = vpack.c.b16 %v151, %v151
  %v168 = vpack.c.b16 %v152, %v152
  %v169 = vpack.c.b16 %v153, %v153
  %v170 = vpack.c.b16 %v154, %v154
  %v171 = vpack.c.b16 %v155, %v155
  %188 = vst [vmem:[%s3] sm:$0xf] %v156
  %189 = vst [vmem:[%s3 + $0x4] sm:$0xf] %v157
  %190 = vst [vmem:[%s3 + $0x8] sm:$0xf] %v158
  %191 = vst [vmem:[%s3 + $0xc] sm:$0xf] %v159
  %192 = vst [vmem:[%s3 + $0x10] sm:$0xf] %v160
  %193 = vst [vmem:[%s3 + $0x14] sm:$0xf] %v161
  %194 = vst [vmem:[%s3 + $0x18] sm:$0xf] %v162
  %195 = vst [vmem:[%s3 + $0x1c] sm:$0xf] %v163
  %196 = vst [vmem:[%s3 + $0x20] sm:$0xf] %v164
  %197 = vst [vmem:[%s3 + $0x24] sm:$0xf] %v165
  %198 = vst [vmem:[%s3 + $0x28] sm:$0xf] %v166
  %199 = vst [vmem:[%s3 + $0x2c] sm:$0xf] %v167
  %200 = vst [vmem:[%s3 + $0x30] sm:$0xf] %v168
  %201 = vst [vmem:[%s3 + $0x34] sm:$0xf] %v169
  %202 = vst [vmem:[%s3 + $0x38] sm:$0xf] %v170
  %203 = vst [vmem:[%s3 + $0x3c] sm:$0xf] %v171
  // Predicated region
  $region14: #{basic_block_forward.5} parent=0 // pred_check
    _
  $region15: #{basic_block_forward.5} parent=0 // pred_check_branch
    %205 = sbr.rel (0) target = $region17
  $region16: #{basic_block_forward.5} parent=0 // pred_region
    _
  $region17: #{basic_block_forward.5} parent=0 // pred_fallthru
    _
  // Predicated region
  $region18: #{basic_block_forward.5} parent=0 // pred_check
    _
  $region19: #{basic_block_forward.5} parent=0 // pred_check_branch
    %207 = sbr.rel (0) target = $region21
  $region20: #{basic_block_forward.5} parent=0 // pred_region
    _
  $region21: #{basic_block_forward.5} parent=0 // pred_fallthru
    _

// kernel: basic_block_forward.4
$region0: #{basic_block_forward.4}
  #allocation0 [shape = 'u32[]', space=smem, size = 0x4, offset = 0x4, fixed_abs, tag = 'smem constant byte address 0x4 - core index']
  #allocation1 [shape = 'u32[144,128]{1,0:T(1,128)}', space=vmem, size = 0x12000, scoped, tag = 'internal scratch']
  #allocation2 [shape = 'f32[1,128]{1,0:T(1,128)}', space=vmem, size = 0x200, scoped, tag = 'scratch operand']
  #allocation3 [shape = 'f32[1,128]{1,0:T(1,128)}', space=vmem, size = 0x200, scoped, tag = 'scratch operand']
  %s0 = inlined_call_operand.vmem [shape: bf16[128,40], index: 0, kind: input, shape index: {}]
  %s1 = inlined_call_operand.vmem [shape: bf16[40,128], index: 1, kind: input, shape index: {}]
  %s2 = inlined_call_operand.vmem [shape: f32[1,128], index: 2, kind: input, shape index: {}]
  %s3 = inlined_call_operand.vmem [shape: f32[1,128], index: 3, kind: input, shape index: {}]
  %s4 = inlined_call_operand.vmem [shape: f32[128,128], index: 4, kind: output, shape index: {0}]
  %s5 = inlined_call_operand.vmem [shape: f32[1,128], index: 5, kind: output, shape index: {1}]
  %s6 = inlined_call_operand.vmem [shape: f32[1,128], index: 6, kind: output, shape index: {2}]
  %7 = xla_tuple %s4, %s5, %s6
  %s8 = sld [smem:[#allocation0]]
  $region50: #{basic_block_forward.4} parent=0
    _
  %s10 = ssub.s32 1, %s8
  %s11 = scalar_select 0, %s10, %s8
  // Predicated region
  $region2: #{basic_block_forward.4} parent=0 // pred_check
    _
  $region3: #{basic_block_forward.4} parent=0 // pred_check_branch
    %13 = sbr.rel (0) target = $region5
  $region4: #{basic_block_forward.4} parent=0 // pred_region
    _
  $region5: #{basic_block_forward.4} parent=0 // pred_fallthru
    _
  // Predicated region
  $region6: #{basic_block_forward.4} parent=0 // pred_check
    _
  $region7: #{basic_block_forward.4} parent=0 // pred_check_branch
    %15 = sbr.rel (0) target = $region9
  $region8: #{basic_block_forward.4} parent=0 // pred_region
    _
  $region9: #{basic_block_forward.4} parent=0 // pred_fallthru
    _
  // Predicated region
  $region10: #{basic_block_forward.4} parent=0 // pred_check
    _
  $region11: #{basic_block_forward.4} parent=0 // pred_check_branch
    %17 = sbr.rel (0) target = $region13
  $region12: #{basic_block_forward.4} parent=0 // pred_region
    _
  $region13: #{basic_block_forward.4} parent=0 // pred_fallthru
    _
  // Predicated region
  $region14: #{basic_block_forward.4} parent=0 // pred_check
    _
  $region15: #{basic_block_forward.4} parent=0 // pred_check_branch
    %19 = sbr.rel (0) target = $region17
  $region16: #{basic_block_forward.4} parent=0 // pred_region
    _
  $region17: #{basic_block_forward.4} parent=0 // pred_fallthru
    _
  %p21 = scmp.eq.s32.totalorder 0, 0
  // Predicated region
  $region18: #{basic_block_forward.4} parent=0 // pred_check
    %p22 = pneg %p21
  $region19: #{basic_block_forward.4} parent=0 // pred_check_branch
    %24 = sbr.rel (%p22) target = $region21
  $region20: #{basic_block_forward.4} parent=0 // pred_region
    %25 = vst [vmem:[#allocation2] sm:$0x1] 0.0
    %26 = vst [vmem:[#allocation3] sm:$0x1] 0.0
  $region21: #{basic_block_forward.4} parent=0 // pred_fallthru
    _
  %v27 = vld [vmem:[%s0] sm:$0xf]
  %v28 = vld [vmem:[%s0 + $0x4] sm:$0xf]
  %v29 = vld [vmem:[%s0 + $0x8] sm:$0xf]
  %v30 = vld [vmem:[%s0 + $0xc] sm:$0xf]
  %v31 = vld [vmem:[%s0 + $0x10] sm:$0xf]
  %v32 = vld [vmem:[%s0 + $0x14] sm:$0xf]
  %v33 = vld [vmem:[%s0 + $0x18] sm:$0xf]
  %v34 = vld [vmem:[%s0 + $0x1c] sm:$0xf]
  %v35 = vld [vmem:[%s0 + $0x20] sm:$0xf]
  %v36 = vld [vmem:[%s0 + $0x24] sm:$0xf]
  %v37 = vld [vmem:[%s0 + $0x28] sm:$0xf]
  %v38 = vld [vmem:[%s0 + $0x2c] sm:$0xf]
  %v39 = vld [vmem:[%s0 + $0x30] sm:$0xf]
  %v40 = vld [vmem:[%s0 + $0x34] sm:$0xf]
  %v41 = vld [vmem:[%s0 + $0x38] sm:$0xf]
  %v42 = vld [vmem:[%s0 + $0x3c] sm:$0xf]
  %v43 = vld [vmem:[%s1] sm:$0xf]
  %v44 = vld [vmem:[%s1 + $0x4] sm:$0xf]
  %v45 = vld [vmem:[%s1 + $0x8] sm:$0xf]
  %v46 = vld [vmem:[%s1 + $0xc] sm:$0xf]
  %v47 = vld [vmem:[%s1 + $0x10] sm:$0xf]
  %v64 = vunpack.c.l.b16 %v27
  %v65 = vunpack.c.l.b16 %v28
  %v66 = vunpack.c.l.b16 %v29
  %v67 = vunpack.c.l.b16 %v30
  %v68 = vunpack.c.l.b16 %v31
  %v69 = vunpack.c.l.b16 %v32
  %v70 = vunpack.c.l.b16 %v33
  %v71 = vunpack.c.l.b16 %v34
  %v72 = vunpack.c.l.b16 %v35
  %v73 = vunpack.c.l.b16 %v36
  %v74 = vunpack.c.l.b16 %v37
  %v75 = vunpack.c.l.b16 %v38
  %v76 = vunpack.c.l.b16 %v39
  %v77 = vunpack.c.l.b16 %v40
  %v78 = vunpack.c.l.b16 %v41
  %v79 = vunpack.c.l.b16 %v42
  %v80 = vpack.c.b16 %v65, %v64
  %v81 = vpack.c.b16 %v67, %v66
  %v82 = vpack.c.b16 %v69, %v68
  %v83 = vpack.c.b16 %v71, %v70
  %v84 = vpack.c.b16 %v73, %v72
  %v85 = vpack.c.b16 %v75, %v74
  %v86 = vpack.c.b16 %v77, %v76
  %v87 = vpack.c.b16 %v79, %v78
  %v93 = vunpack.c.l.b16 %v43
  %v94 = vunpack.c.l.b16 %v44
  %v95 = vunpack.c.l.b16 %v45
  %v96 = vunpack.c.l.b16 %v46
  %v97 = vunpack.c.l.b16 %v47
  %v98 = vpack.c.b16 %v94, %v93
  %v99 = vpack.c.b16 %v96, %v95
  %v100 = vpack.c.b16 %v97, %v97
  %vm103 = vcmask 326656
  %v105 = vsel %vm103, %v80, 0
  %v108 = vsel %vm103, %v81, 0
  %v111 = vsel %vm103, %v82, 0
  %v114 = vsel %vm103, %v83, 0
  %v117 = vsel %vm103, %v84, 0
  %v120 = vsel %vm103, %v85, 0
  %v123 = vsel %vm103, %v86, 0
  %v126 = vsel %vm103, %v87, 0
  %vm128 = vcmask 1043456
  %v130 = vsel %vm128, %v100, 0
  %132 = vmatprep.subr.bf16.mxu0 0
  %133 = vmatpush1.bf16.msra.mxu0 %v98
  %134 = vmatprep.subr.bf16.mxu0 0
  %135 = vmatpush1.bf16.msra.mxu0 %v99
  %136 = vmatprep.subr.bf16.mxu0 0
  %137 = vmatpush1.bf16.msra.mxu0 %v130
  %138 = vmatprep.subr.bf16.mxu0 0
  %139 = vmatpush1.bf16.msra.mxu0 0
  %140 = vmatprep.subr.bf16.mxu0 0
  %141 = vmatpush1.bf16.msra.mxu0 0
  %142 = vmatprep.subr.bf16.mxu0 0
  %143 = vmatpush1.bf16.msra.mxu0 0
  %144 = vmatprep.subr.bf16.mxu0 0
  %145 = vmatpush1.bf16.msra.mxu0 0
  %146 = vmatprep.subr.bf16.mxu0 0
  %147 = vmatpush1.bf16.msra.mxu0 0
  %148 = vmatprep.subr.bf16.mxu0 0
  %149 = vmatpush1.bf16.msra.mxu0 0
  %150 = vmatprep.subr.bf16.mxu0 0
  %151 = vmatpush1.bf16.msra.mxu0 0
  %152 = vmatprep.subr.bf16.mxu0 0
  %153 = vmatpush1.bf16.msra.mxu0 0
  %154 = vmatprep.subr.bf16.mxu0 0
  %155 = vmatpush1.bf16.msra.mxu0 0
  %156 = vmatprep.subr.bf16.mxu0 0
  %157 = vmatpush1.bf16.msra.mxu0 0
  %158 = vmatprep.subr.bf16.mxu0 0
  %159 = vmatpush1.bf16.msra.mxu0 0
  %160 = vmatprep.subr.bf16.mxu0 0
  %161 = vmatpush1.bf16.msra.mxu0 0
  %162 = vmatprep.subr.bf16.mxu0 0
  %163 = vmatpush1.bf16.msra.mxu0 0
  %164 = vmatprep.mubr.bf16.mxu0 0
  %165 = vmatmul.mubr.bf16.gmra.mrb[0].mxu0 %v105
  %v166 = vpop.f32.mrb[0].mxu0
  %v167 = vadd.f32 0.0, %v166
  %v168 = vpop.f32.mrb[0].mxu0
  %v169 = vpop.f32.mrb[0].mxu0
  %v170 = vadd.f32 0.0, %v169
  %v171 = vpop.f32.mrb[0].mxu0
  %172 = vmatprep.mubr.bf16.mxu0 0
  %173 = vmatmul.mubr.bf16.gmra.mrb[0].mxu0 %v108
  %v174 = vpop.f32.mrb[0].mxu0
  %v175 = vadd.f32 0.0, %v174
  %v176 = vpop.f32.mrb[0].mxu0
  %v177 = vpop.f32.mrb[0].mxu0
  %v178 = vadd.f32 0.0, %v177
  %v179 = vpop.f32.mrb[0].mxu0
  %180 = vmatprep.mubr.bf16.mxu0 0
  %181 = vmatmul.mubr.bf16.gmra.mrb[0].mxu0 %v111
  %v182 = vpop.f32.mrb[0].mxu0
  %v183 = vadd.f32 0.0, %v182
  %v184 = vpop.f32.mrb[0].mxu0
  %v185 = vpop.f32.mrb[0].mxu0
  %v186 = vadd.f32 0.0, %v185
  %v187 = vpop.f32.mrb[0].mxu0
  %188 = vmatprep.mubr.bf16.mxu0 0
  %189 = vmatmul.mubr.bf16.gmra.mrb[0].mxu0 %v114
  %v190 = vpop.f32.mrb[0].mxu0
  %v191 = vadd.f32 0.0, %v190
  %v192 = vpop.f32.mrb[0].mxu0
  %v193 = vpop.f32.mrb[0].mxu0
  %v194 = vadd.f32 0.0, %v193
  %v195 = vpop.f32.mrb[0].mxu0
  %196 = vmatprep.mubr.bf16.mxu0 0
  %197 = vmatmul.mubr.bf16.gmra.mrb[0].mxu0 %v117
  %v198 = vpop.f32.mrb[0].mxu0
  %v199 = vadd.f32 0.0, %v198
  %v200 = vpop.f32.mrb[0].mxu0
  %v201 = vpop.f32.mrb[0].mxu0
  %v202 = vadd.f32 0.0, %v201
  %v203 = vpop.f32.mrb[0].mxu0
  %204 = vmatprep.mubr.bf16.mxu0 0
  %205 = vmatmul.mubr.bf16.gmra.mrb[0].mxu0 %v120
  %v206 = vpop.f32.mrb[0].mxu0
  %v207 = vadd.f32 0.0, %v206
  %v208 = vpop.f32.mrb[0].mxu0
  %v209 = vpop.f32.mrb[0].mxu0
  %v210 = vadd.f32 0.0, %v209
  %v211 = vpop.f32.mrb[0].mxu0
  %212 = vmatprep.mubr.bf16.mxu0 0
  %213 = vmatmul.mubr.bf16.gmra.mrb[0].mxu0 %v123
  %v214 = vpop.f32.mrb[0].mxu0
  %v215 = vadd.f32 0.0, %v214
  %v216 = vpop.f32.mrb[0].mxu0
  %v217 = vpop.f32.mrb[0].mxu0
  %v218 = vadd.f32 0.0, %v217
  %v219 = vpop.f32.mrb[0].mxu0
  %220 = vmatprep.mubr.bf16.mxu0 0
  %221 = vmatmul.mubr.bf16.gmra.mrb[0].mxu0 %v126
  %v222 = vpop.f32.mrb[0].mxu0
  %v223 = vadd.f32 0.0, %v222
  %v224 = vpop.f32.mrb[0].mxu0
  %v225 = vpop.f32.mrb[0].mxu0
  %v226 = vadd.f32 0.0, %v225
  %v227 = vpop.f32.mrb[0].mxu0
  %228 = vdwg.mxu0
  %229 = vst [vmem:[%s4] sm:$0xff] %v167
  %230 = vst [vmem:[%s4 + $0x8] sm:$0xff] %v170
  %231 = vst [vmem:[%s4 + $0x10] sm:$0xff] %v175
  %232 = vst [vmem:[%s4 + $0x18] sm:$0xff] %v178
  %233 = vst [vmem:[%s4 + $0x20] sm:$0xff] %v183
  %234 = vst [vmem:[%s4 + $0x28] sm:$0xff] %v186
  %235 = vst [vmem:[%s4 + $0x30] sm:$0xff] %v191
  %236 = vst [vmem:[%s4 + $0x38] sm:$0xff] %v194
  %237 = vst [vmem:[%s4 + $0x40] sm:$0xff] %v199
  %238 = vst [vmem:[%s4 + $0x48] sm:$0xff] %v202
  %239 = vst [vmem:[%s4 + $0x50] sm:$0xff] %v207
  %240 = vst [vmem:[%s4 + $0x58] sm:$0xff] %v210
  %241 = vst [vmem:[%s4 + $0x60] sm:$0xff] %v215
  %242 = vst [vmem:[%s4 + $0x68] sm:$0xff] %v218
  %243 = vst [vmem:[%s4 + $0x70] sm:$0xff] %v223
  %244 = vst [vmem:[%s4 + $0x78] sm:$0xff] %v226
  %v245 = vld [vmem:[#allocation2] sm:$0x1]
  %v246 = vadd.f32 %v167, %v170
  %v247 = vadd.f32 %v246, %v175
  %v248 = vadd.f32 %v247, %v178
  %v249 = vadd.f32 %v248, %v183
  %v250 = vadd.f32 %v249, %v186
  %v251 = vadd.f32 %v250, %v191
  %v252 = vadd.f32 %v251, %v194
  %v253 = vadd.f32 %v252, %v199
  %v254 = vadd.f32 %v253, %v202
  %v255 = vadd.f32 %v254, %v207
  %v256 = vadd.f32 %v255, %v210
  %v257 = vadd.f32 %v256, %v215
  %v258 = vadd.f32 %v257, %v218
  %v259 = vadd.f32 %v258, %v223
  %v260 = vadd.f32 %v259, %v226
  %v261 = vrot.slane %v260, 4
  %v262 = vadd.f32 %v260, %v261
  %v263 = vrot.slane %v262, 2
  %v264 = vadd.f32 %v262, %v263
  %v265 = vrot.slane %v264, 1
  %v266 = vadd.f32 %v264, %v265
  %v267 = vadd.f32 %v245, %v266
  %268 = vst [vmem:[#allocation2] sm:$0x1] %v267
  %v269 = vld [vmem:[#allocation3] sm:$0x1]
  %v270 = vmul.f32 %v167, %v167
  %v271 = vmul.f32 %v170, %v170
  %v272 = vmul.f32 %v175, %v175
  %v273 = vmul.f32 %v178, %v178
  %v274 = vmul.f32 %v183, %v183
  %v275 = vmul.f32 %v186, %v186
  %v276 = vmul.f32 %v191, %v191
  %v277 = vmul.f32 %v194, %v194
  %v278 = vmul.f32 %v199, %v199
  %v279 = vmul.f32 %v202, %v202
  %v280 = vmul.f32 %v207, %v207
  %v281 = vmul.f32 %v210, %v210
  %v282 = vmul.f32 %v215, %v215
  %v283 = vmul.f32 %v218, %v218
  %v284 = vmul.f32 %v223, %v223
  %v285 = vmul.f32 %v226, %v226
  %v286 = vadd.f32 %v270, %v271
  %v287 = vadd.f32 %v286, %v272
  %v288 = vadd.f32 %v287, %v273
  %v289 = vadd.f32 %v288, %v274
  %v290 = vadd.f32 %v289, %v275
  %v291 = vadd.f32 %v290, %v276
  %v292 = vadd.f32 %v291, %v277
  %v293 = vadd.f32 %v292, %v278
  %v294 = vadd.f32 %v293, %v279
  %v295 = vadd.f32 %v294, %v280
  %v296 = vadd.f32 %v295, %v281
  %v297 = vadd.f32 %v296, %v282
  %v298 = vadd.f32 %v297, %v283
  %v299 = vadd.f32 %v298, %v284
  %v300 = vadd.f32 %v299, %v285
  %v301 = vrot.slane %v300, 4
  %v302 = vadd.f32 %v300, %v301
  %v303 = vrot.slane %v302, 2
  %v304 = vadd.f32 %v302, %v303
  %v305 = vrot.slane %v304, 1
  %v306 = vadd.f32 %v304, %v305
  %v307 = vadd.f32 %v269, %v306
  %308 = vst [vmem:[#allocation3] sm:$0x1] %v307
  // Predicated region
  $region22: #{basic_block_forward.4} parent=0 // pred_check
    %p309 = pneg %p21
  $region23: #{basic_block_forward.4} parent=0 // pred_check_branch
    %311 = sbr.rel (%p309) target = $region25
  $region24: #{basic_block_forward.4} parent=0 // pred_region
    %v312 = vld [vmem:[#allocation2] sm:$0x1]
    %v313 = vmul.f32 %v312, 0.0078125
    %v314 = vld [vmem:[#allocation3] sm:$0x1]
    %v315 = vmul.f32 %v314, 0.0078125
    %v316 = vmul.f32 %v313, %v313
    %v317 = vsub.f32 %v315, %v316
    %v318 = vmax.f32 %v317, 0.0
    %v319 = vld [vmem:[%s2] sm:$0x1]
    %v320 = vadd.f32 %v318, 1e-05
    %v321 = vrsqrt.pop %v320
    %v322 = vmul.f32 %v319, %v321
    %323 = vst [vmem:[%s5] sm:$0x1] %v322
    %v324 = vld [vmem:[%s3] sm:$0x1]
    %v325 = vmul.f32 %v313, %v322
    %v326 = vsub.f32 %v324, %v325
    %327 = vst [vmem:[%s6] sm:$0x1] %v326
  $region25: #{basic_block_forward.4} parent=0 // pred_fallthru
    _
  // Predicated region
  $region26: #{basic_block_forward.4} parent=0 // pred_check
    _
  $region27: #{basic_block_forward.4} parent=0 // pred_check_branch
    %329 = sbr.rel (0) target = $region29
  $region28: #{basic_block_forward.4} parent=0 // pred_region
    _
  $region29: #{basic_block_forward.4} parent=0 // pred_fallthru
    _
  // Predicated region
  $region30: #{basic_block_forward.4} parent=0 // pred_check
    _
  $region31: #{basic_block_forward.4} parent=0 // pred_check_branch
    %331 = sbr.rel (0) target = $region33
  $region32: #{basic_block_forward.4} parent=0 // pred_region
    _
  $region33: #{basic_block_forward.4} parent=0 // pred_fallthru
    _
  // Predicated region
  $region34: #{basic_block_forward.4} parent=0 // pred_check
    _
  $region35: #{basic_block_forward.4} parent=0 // pred_check_branch
    %333 = sbr.rel (0) target = $region37
  $region36: #{basic_block_forward.4} parent=0 // pred_region
    _
  $region37: #{basic_block_forward.4} parent=0 // pred_fallthru
    _
  // Predicated region
  $region38: #{basic_block_forward.4} parent=0 // pred_check
    _
  $region39: #{basic_block_forward.4} parent=0 // pred_check_branch
    %335 = sbr.rel (0) target = $region41
  $region40: #{basic_block_forward.4} parent=0 // pred_region
    _
  $region41: #{basic_block_forward.4} parent=0 // pred_fallthru
    _
  // Predicated region
  $region42: #{basic_block_forward.4} parent=0 // pred_check
    _
  $region43: #{basic_block_forward.4} parent=0 // pred_check_branch
    %337 = sbr.rel (0) target = $region45
  $region44: #{basic_block_forward.4} parent=0 // pred_region
    _
  $region45: #{basic_block_forward.4} parent=0 // pred_fallthru
    _
  // Predicated region
  $region46: #{basic_block_forward.4} parent=0 // pred_check
    _
  $region47: #{basic_block_forward.4} parent=0 // pred_check_branch
    %339 = sbr.rel (0) target = $region49
  $region48: #{basic_block_forward.4} parent=0 // pred_region
    _
  $region49: #{basic_block_forward.4} parent=0 // pred_fallthru
    _

// kernel: basic_block_forward.6
$region0: #{basic_block_forward.6}
  #allocation0 [shape = 'u32[]', space=smem, size = 0x4, offset = 0x4, fixed_abs, tag = 'smem constant byte address 0x4 - core index']
  #allocation1 [shape = 'u32[144,128]{1,0:T(1,128)}', space=vmem, size = 0x12000, scoped, tag = 'internal scratch']
  #allocation2 [shape = 'f32[1,128]{1,0:T(1,128)}', space=vmem, size = 0x200, scoped, tag = 'scratch operand']
  #allocation3 [shape = 'f32[1,128]{1,0:T(1,128)}', space=vmem, size = 0x200, scoped, tag = 'scratch operand']
  %s0 = inlined_call_operand.vmem [shape: bf16[128,72], index: 0, kind: input, shape index: {}]
  %s1 = inlined_call_operand.vmem [shape: bf16[72,128], index: 1, kind: input, shape index: {}]
  %s2 = inlined_call_operand.vmem [shape: f32[1,128], index: 2, kind: input, shape index: {}]
  %s3 = inlined_call_operand.vmem [shape: f32[1,128], index: 3, kind: input, shape index: {}]
  %s4 = inlined_call_operand.vmem [shape: f32[128,128], index: 4, kind: output, shape index: {0}]
  %s5 = inlined_call_operand.vmem [shape: f32[1,128], index: 5, kind: output, shape index: {1}]
  %s6 = inlined_call_operand.vmem [shape: f32[1,128], index: 6, kind: output, shape index: {2}]
  %7 = xla_tuple %s4, %s5, %s6
  %s8 = sld [smem:[#allocation0]]
  $region50: #{basic_block_forward.6} parent=0
    _
  %s10 = ssub.s32 1, %s8
  %s11 = scalar_select 0, %s10, %s8
  // Predicated region
  $region2: #{basic_block_forward.6} parent=0 // pred_check
    _
  $region3: #{basic_block_forward.6} parent=0 // pred_check_branch
    %13 = sbr.rel (0) target = $region5
  $region4: #{basic_block_forward.6} parent=0 // pred_region
    _
  $region5: #{basic_block_forward.6} parent=0 // pred_fallthru
    _
  // Predicated region
  $region6: #{basic_block_forward.6} parent=0 // pred_check
    _
  $region7: #{basic_block_forward.6} parent=0 // pred_check_branch
    %15 = sbr.rel (0) target = $region9
  $region8: #{basic_block_forward.6} parent=0 // pred_region
    _
  $region9: #{basic_block_forward.6} parent=0 // pred_fallthru
    _
  // Predicated region
  $region10: #{basic_block_forward.6} parent=0 // pred_check
    _
  $region11: #{basic_block_forward.6} parent=0 // pred_check_branch
    %17 = sbr.rel (0) target = $region13
  $region12: #{basic_block_forward.6} parent=0 // pred_region
    _
  $region13: #{basic_block_forward.6} parent=0 // pred_fallthru
    _
  // Predicated region
  $region14: #{basic_block_forward.6} parent=0 // pred_check
    _
  $region15: #{basic_block_forward.6} parent=0 // pred_check_branch
    %19 = sbr.rel (0) target = $region17
  $region16: #{basic_block_forward.6} parent=0 // pred_region
    _
  $region17: #{basic_block_forward.6} parent=0 // pred_fallthru
    _
  %p21 = scmp.eq.s32.totalorder 0, 0
  // Predicated region
  $region18: #{basic_block_forward.6} parent=0 // pred_check
    %p22 = pneg %p21
  $region19: #{basic_block_forward.6} parent=0 // pred_check_branch
    %24 = sbr.rel (%p22) target = $region21
  $region20: #{basic_block_forward.6} parent=0 // pred_region
    %25 = vst [vmem:[#allocation2] sm:$0x1] 0.0
    %26 = vst [vmem:[#allocation3] sm:$0x1] 0.0
  $region21: #{basic_block_forward.6} parent=0 // pred_fallthru
    _
  %v27 = vld [vmem:[%s0] sm:$0xf]
  %v28 = vld [vmem:[%s0 + $0x4] sm:$0xf]
  %v29 = vld [vmem:[%s0 + $0x8] sm:$0xf]
  %v30 = vld [vmem:[%s0 + $0xc] sm:$0xf]
  %v31 = vld [vmem:[%s0 + $0x10] sm:$0xf]
  %v32 = vld [vmem:[%s0 + $0x14] sm:$0xf]
  %v33 = vld [vmem:[%s0 + $0x18] sm:$0xf]
  %v34 = vld [vmem:[%s0 + $0x1c] sm:$0xf]
  %v35 = vld [vmem:[%s0 + $0x20] sm:$0xf]
  %v36 = vld [vmem:[%s0 + $0x24] sm:$0xf]
  %v37 = vld [vmem:[%s0 + $0x28] sm:$0xf]
  %v38 = vld [vmem:[%s0 + $0x2c] sm:$0xf]
  %v39 = vld [vmem:[%s0 + $0x30] sm:$0xf]
  %v40 = vld [vmem:[%s0 + $0x34] sm:$0xf]
  %v41 = vld [vmem:[%s0 + $0x38] sm:$0xf]
  %v42 = vld [vmem:[%s0 + $0x3c] sm:$0xf]
  %v43 = vld [vmem:[%s1] sm:$0xf]
  %v44 = vld [vmem:[%s1 + $0x4] sm:$0xf]
  %v45 = vld [vmem:[%s1 + $0x8] sm:$0xf]
  %v46 = vld [vmem:[%s1 + $0xc] sm:$0xf]
  %v47 = vld [vmem:[%s1 + $0x10] sm:$0xf]
  %v48 = vld [vmem:[%s1 + $0x14] sm:$0xf]
  %v49 = vld [vmem:[%s1 + $0x18] sm:$0xf]
  %v50 = vld [vmem:[%s1 + $0x1c] sm:$0xf]
  %v51 = vld [vmem:[%s1 + $0x20] sm:$0xf]
  %v68 = vunpack.c.l.b16 %v27
  %v69 = vunpack.c.l.b16 %v28
  %v70 = vunpack.c.l.b16 %v29
  %v71 = vunpack.c.l.b16 %v30
  %v72 = vunpack.c.l.b16 %v31
  %v73 = vunpack.c.l.b16 %v32
  %v74 = vunpack.c.l.b16 %v33
  %v75 = vunpack.c.l.b16 %v34
  %v76 = vunpack.c.l.b16 %v35
  %v77 = vunpack.c.l.b16 %v36
  %v78 = vunpack.c.l.b16 %v37
  %v79 = vunpack.c.l.b16 %v38
  %v80 = vunpack.c.l.b16 %v39
  %v81 = vunpack.c.l.b16 %v40
  %v82 = vunpack.c.l.b16 %v41
  %v83 = vunpack.c.l.b16 %v42
  %v84 = vpack.c.b16 %v69, %v68
  %v85 = vpack.c.b16 %v71, %v70
  %v86 = vpack.c.b16 %v73, %v72
  %v87 = vpack.c.b16 %v75, %v74
  %v88 = vpack.c.b16 %v77, %v76
  %v89 = vpack.c.b16 %v79, %v78
  %v90 = vpack.c.b16 %v81, %v80
  %v91 = vpack.c.b16 %v83, %v82
  %v101 = vunpack.c.l.b16 %v43
  %v102 = vunpack.c.l.b16 %v44
  %v103 = vunpack.c.l.b16 %v45
  %v104 = vunpack.c.l.b16 %v46
  %v105 = vunpack.c.l.b16 %v47
  %v106 = vunpack.c.l.b16 %v48
  %v107 = vunpack.c.l.b16 %v49
  %v108 = vunpack.c.l.b16 %v50
  %v109 = vunpack.c.l.b16 %v51
  %v110 = vpack.c.b16 %v102, %v101
  %v111 = vpack.c.b16 %v104, %v103
  %v112 = vpack.c.b16 %v106, %v105
  %v113 = vpack.c.b16 %v108, %v107
  %v114 = vpack.c.b16 %v109, %v109
  %vm119 = vcmask 588800
  %v121 = vsel %vm119, %v84, 0
  %v124 = vsel %vm119, %v85, 0
  %v127 = vsel %vm119, %v86, 0
  %v130 = vsel %vm119, %v87, 0
  %v133 = vsel %vm119, %v88, 0
  %v136 = vsel %vm119, %v89, 0
  %v139 = vsel %vm119, %v90, 0
  %v142 = vsel %vm119, %v91, 0
  %vm144 = vcmask 1043456
  %v146 = vsel %vm144, %v114, 0
  %148 = vmatprep.subr.bf16.mxu0 0
  %149 = vmatpush1.bf16.msra.mxu0 %v110
  %150 = vmatprep.subr.bf16.mxu0 0
  %151 = vmatpush1.bf16.msra.mxu0 %v111
  %152 = vmatprep.subr.bf16.mxu0 0
  %153 = vmatpush1.bf16.msra.mxu0 %v112
  %154 = vmatprep.subr.bf16.mxu0 0
  %155 = vmatpush1.bf16.msra.mxu0 %v113
  %156 = vmatprep.subr.bf16.mxu0 0
  %157 = vmatpush1.bf16.msra.mxu0 %v146
  %158 = vmatprep.subr.bf16.mxu0 0
  %159 = vmatpush1.bf16.msra.mxu0 0
  %160 = vmatprep.subr.bf16.mxu0 0
  %161 = vmatpush1.bf16.msra.mxu0 0
  %162 = vmatprep.subr.bf16.mxu0 0
  %163 = vmatpush1.bf16.msra.mxu0 0
  %164 = vmatprep.subr.bf16.mxu0 0
  %165 = vmatpush1.bf16.msra.mxu0 0
  %166 = vmatprep.subr.bf16.mxu0 0
  %167 = vmatpush1.bf16.msra.mxu0 0
  %168 = vmatprep.subr.bf16.mxu0 0
  %169 = vmatpush1.bf16.msra.mxu0 0
  %170 = vmatprep.subr.bf16.mxu0 0
  %171 = vmatpush1.bf16.msra.mxu0 0
  %172 = vmatprep.subr.bf16.mxu0 0
  %173 = vmatpush1.bf16.msra.mxu0 0
  %174 = vmatprep.subr.bf16.mxu0 0
  %175 = vmatpush1.bf16.msra.mxu0 0
  %176 = vmatprep.subr.bf16.mxu0 0
  %177 = vmatpush1.bf16.msra.mxu0 0
  %178 = vmatprep.subr.bf16.mxu0 0
  %179 = vmatpush1.bf16.msra.mxu0 0
  %180 = vmatprep.mubr.bf16.mxu0 0
  %181 = vmatmul.mubr.bf16.gmra.mrb[0].mxu0 %v121
  %v182 = vpop.f32.mrb[0].mxu0
  %v183 = vadd.f32 0.0, %v182
  %v184 = vpop.f32.mrb[0].mxu0
  %v185 = vpop.f32.mrb[0].mxu0
  %v186 = vadd.f32 0.0, %v185
  %v187 = vpop.f32.mrb[0].mxu0
  %188 = vmatprep.mubr.bf16.mxu0 0
  %189 = vmatmul.mubr.bf16.gmra.mrb[0].mxu0 %v124
  %v190 = vpop.f32.mrb[0].mxu0
  %v191 = vadd.f32 0.0, %v190
  %v192 = vpop.f32.mrb[0].mxu0
  %v193 = vpop.f32.mrb[0].mxu0
  %v194 = vadd.f32 0.0, %v193
  %v195 = vpop.f32.mrb[0].mxu0
  %196 = vmatprep.mubr.bf16.mxu0 0
  %197 = vmatmul.mubr.bf16.gmra.mrb[0].mxu0 %v127
  %v198 = vpop.f32.mrb[0].mxu0
  %v199 = vadd.f32 0.0, %v198
  %v200 = vpop.f32.mrb[0].mxu0
  %v201 = vpop.f32.mrb[0].mxu0
  %v202 = vadd.f32 0.0, %v201
  %v203 = vpop.f32.mrb[0].mxu0
  %204 = vmatprep.mubr.bf16.mxu0 0
  %205 = vmatmul.mubr.bf16.gmra.mrb[0].mxu0 %v130
  %v206 = vpop.f32.mrb[0].mxu0
  %v207 = vadd.f32 0.0, %v206
  %v208 = vpop.f32.mrb[0].mxu0
  %v209 = vpop.f32.mrb[0].mxu0
  %v210 = vadd.f32 0.0, %v209
  %v211 = vpop.f32.mrb[0].mxu0
  %212 = vmatprep.mubr.bf16.mxu0 0
  %213 = vmatmul.mubr.bf16.gmra.mrb[0].mxu0 %v133
  %v214 = vpop.f32.mrb[0].mxu0
  %v215 = vadd.f32 0.0, %v214
  %v216 = vpop.f32.mrb[0].mxu0
  %v217 = vpop.f32.mrb[0].mxu0
  %v218 = vadd.f32 0.0, %v217
  %v219 = vpop.f32.mrb[0].mxu0
  %220 = vmatprep.mubr.bf16.mxu0 0
  %221 = vmatmul.mubr.bf16.gmra.mrb[0].mxu0 %v136
  %v222 = vpop.f32.mrb[0].mxu0
  %v223 = vadd.f32 0.0, %v222
  %v224 = vpop.f32.mrb[0].mxu0
  %v225 = vpop.f32.mrb[0].mxu0
  %v226 = vadd.f32 0.0, %v225
  %v227 = vpop.f32.mrb[0].mxu0
  %228 = vmatprep.mubr.bf16.mxu0 0
  %229 = vmatmul.mubr.bf16.gmra.mrb[0].mxu0 %v139
  %v230 = vpop.f32.mrb[0].mxu0
  %v231 = vadd.f32 0.0, %v230
  %v232 = vpop.f32.mrb[0].mxu0
  %v233 = vpop.f32.mrb[0].mxu0
  %v234 = vadd.f32 0.0, %v233
  %v235 = vpop.f32.mrb[0].mxu0
  %236 = vmatprep.mubr.bf16.mxu0 0
  %237 = vmatmul.mubr.bf16.gmra.mrb[0].mxu0 %v142
  %v238 = vpop.f32.mrb[0].mxu0
  %v239 = vadd.f32 0.0, %v238
  %v240 = vpop.f32.mrb[0].mxu0
  %v241 = vpop.f32.mrb[0].mxu0
  %v242 = vadd.f32 0.0, %v241
  %v243 = vpop.f32.mrb[0].mxu0
  %244 = vdwg.mxu0
  %245 = vst [vmem:[%s4] sm:$0xff] %v183
  %246 = vst [vmem:[%s4 + $0x8] sm:$0xff] %v186
  %247 = vst [vmem:[%s4 + $0x10] sm:$0xff] %v191
  %248 = vst [vmem:[%s4 + $0x18] sm:$0xff] %v194
  %249 = vst [vmem:[%s4 + $0x20] sm:$0xff] %v199
  %250 = vst [vmem:[%s4 + $0x28] sm:$0xff] %v202
  %251 = vst [vmem:[%s4 + $0x30] sm:$0xff] %v207
  %252 = vst [vmem:[%s4 + $0x38] sm:$0xff] %v210
  %253 = vst [vmem:[%s4 + $0x40] sm:$0xff] %v215
  %254 = vst [vmem:[%s4 + $0x48] sm:$0xff] %v218
  %255 = vst [vmem:[%s4 + $0x50] sm:$0xff] %v223
  %256 = vst [vmem:[%s4 + $0x58] sm:$0xff] %v226
  %257 = vst [vmem:[%s4 + $0x60] sm:$0xff] %v231
  %258 = vst [vmem:[%s4 + $0x68] sm:$0xff] %v234
  %259 = vst [vmem:[%s4 + $0x70] sm:$0xff] %v239
  %260 = vst [vmem:[%s4 + $0x78] sm:$0xff] %v242
  %v261 = vld [vmem:[#allocation2] sm:$0x1]
  %v262 = vadd.f32 %v183, %v186
  %v263 = vadd.f32 %v262, %v191
  %v264 = vadd.f32 %v263, %v194
  %v265 = vadd.f32 %v264, %v199
  %v266 = vadd.f32 %v265, %v202
  %v267 = vadd.f32 %v266, %v207
  %v268 = vadd.f32 %v267, %v210
  %v269 = vadd.f32 %v268, %v215
  %v270 = vadd.f32 %v269, %v218
  %v271 = vadd.f32 %v270, %v223
  %v272 = vadd.f32 %v271, %v226
  %v273 = vadd.f32 %v272, %v231
  %v274 = vadd.f32 %v273, %v234
  %v275 = vadd.f32 %v274, %v239
  %v276 = vadd.f32 %v275, %v242
  %v277 = vrot.slane %v276, 4
  %v278 = vadd.f32 %v276, %v277
  %v279 = vrot.slane %v278, 2
  %v280 = vadd.f32 %v278, %v279
  %v281 = vrot.slane %v280, 1
  %v282 = vadd.f32 %v280, %v281
  %v283 = vadd.f32 %v261, %v282
  %284 = vst [vmem:[#allocation2] sm:$0x1] %v283
  %v285 = vld [vmem:[#allocation3] sm:$0x1]
  %v286 = vmul.f32 %v183, %v183
  %v287 = vmul.f32 %v186, %v186
  %v288 = vmul.f32 %v191, %v191
  %v289 = vmul.f32 %v194, %v194
  %v290 = vmul.f32 %v199, %v199
  %v291 = vmul.f32 %v202, %v202
  %v292 = vmul.f32 %v207, %v207
  %v293 = vmul.f32 %v210, %v210
  %v294 = vmul.f32 %v215, %v215
  %v295 = vmul.f32 %v218, %v218
  %v296 = vmul.f32 %v223, %v223
  %v297 = vmul.f32 %v226, %v226
  %v298 = vmul.f32 %v231, %v231
  %v299 = vmul.f32 %v234, %v234
  %v300 = vmul.f32 %v239, %v239
  %v301 = vmul.f32 %v242, %v242
  %v302 = vadd.f32 %v286, %v287
  %v303 = vadd.f32 %v302, %v288
  %v304 = vadd.f32 %v303, %v289
  %v305 = vadd.f32 %v304, %v290
  %v306 = vadd.f32 %v305, %v291
  %v307 = vadd.f32 %v306, %v292
  %v308 = vadd.f32 %v307, %v293
  %v309 = vadd.f32 %v308, %v294
  %v310 = vadd.f32 %v309, %v295
  %v311 = vadd.f32 %v310, %v296
  %v312 = vadd.f32 %v311, %v297
  %v313 = vadd.f32 %v312, %v298
  %v314 = vadd.f32 %v313, %v299
  %v315 = vadd.f32 %v314, %v300
  %v316 = vadd.f32 %v315, %v301
  %v317 = vrot.slane %v316, 4
  %v318 = vadd.f32 %v316, %v317
  %v319 = vrot.slane %v318, 2
  %v320 = vadd.f32 %v318, %v319
  %v321 = vrot.slane %v320, 1
  %v322 = vadd.f32 %v320, %v321
  %v323 = vadd.f32 %v285, %v322
  %324 = vst [vmem:[#allocation3] sm:$0x1] %v323
  // Predicated region
  $region22: #{basic_block_forward.6} parent=0 // pred_check
    %p325 = pneg %p21
  $region23: #{basic_block_forward.6} parent=0 // pred_check_branch
    %327 = sbr.rel (%p325) target = $region25
  $region24: #{basic_block_forward.6} parent=0 // pred_region
    %v328 = vld [vmem:[#allocation2] sm:$0x1]
    %v329 = vmul.f32 %v328, 0.0078125
    %v330 = vld [vmem:[#allocation3] sm:$0x1]
    %v331 = vmul.f32 %v330, 0.0078125
    %v332 = vmul.f32 %v329, %v329
    %v333 = vsub.f32 %v331, %v332
    %v334 = vmax.f32 %v333, 0.0
    %v335 = vld [vmem:[%s2] sm:$0x1]
    %v336 = vadd.f32 %v334, 1e-05
    %v337 = vrsqrt.pop %v336
    %v338 = vmul.f32 %v335, %v337
    %339 = vst [vmem:[%s5] sm:$0x1] %v338
    %v340 = vld [vmem:[%s3] sm:$0x1]
    %v341 = vmul.f32 %v329, %v338
    %v342 = vsub.f32 %v340, %v341
    %343 = vst [vmem:[%s6] sm:$0x1] %v342
  $region25: #{basic_block_forward.6} parent=0 // pred_fallthru
    _
  // Predicated region
  $region26: #{basic_block_forward.6} parent=0 // pred_check
    _
  $region27: #{basic_block_forward.6} parent=0 // pred_check_branch
    %345 = sbr.rel (0) target = $region29
  $region28: #{basic_block_forward.6} parent=0 // pred_region
    _
  $region29: #{basic_block_forward.6} parent=0 // pred_fallthru
    _
  // Predicated region
  $region30: #{basic_block_forward.6} parent=0 // pred_check
    _
  $region31: #{basic_block_forward.6} parent=0 // pred_check_branch
    %347 = sbr.rel (0) target = $region33
  $region32: #{basic_block_forward.6} parent=0 // pred_region
    _
  $region33: #{basic_block_forward.6} parent=0 // pred_fallthru
    _
  // Predicated region
  $region34: #{basic_block_forward.6} parent=0 // pred_check
    _
  $region35: #{basic_block_forward.6} parent=0 // pred_check_branch
    %349 = sbr.rel (0) target = $region37
  $region36: #{basic_block_forward.6} parent=0 // pred_region
    _
  $region37: #{basic_block_forward.6} parent=0 // pred_fallthru
    _
  // Predicated region
  $region38: #{basic_block_forward.6} parent=0 // pred_check
    _
  $region39: #{basic_block_forward.6} parent=0 // pred_check_branch
    %351 = sbr.rel (0) target = $region41
  $region40: #{basic_block_forward.6} parent=0 // pred_region
    _
  $region41: #{basic_block_forward.6} parent=0 // pred_fallthru
    _
  // Predicated region
  $region42: #{basic_block_forward.6} parent=0 // pred_check
    _
  $region43: #{basic_block_forward.6} parent=0 // pred_check_branch
    %353 = sbr.rel (0) target = $region45
  $region44: #{basic_block_forward.6} parent=0 // pred_region
    _
  $region45: #{basic_block_forward.6} parent=0 // pred_fallthru
    _
  // Predicated region
  $region46: #{basic_block_forward.6} parent=0 // pred_check
    _
  $region47: #{basic_block_forward.6} parent=0 // pred_check_branch
    %355 = sbr.rel (0) target = $region49
  $region48: #{basic_block_forward.6} parent=0 // pred_region
    _
  $region49: #{basic_block_forward.6} parent=0 // pred_fallthru
    _

// kernel: basic_block_forward.7
$region0: #{basic_block_forward.7}
  #allocation0 [shape = 'u32[]', space=smem, size = 0x4, offset = 0x4, fixed_abs, tag = 'smem constant byte address 0x4 - core index']
  #allocation1 [shape = 'u32[144,128]{1,0:T(1,128)}', space=vmem, size = 0x12000, scoped, tag = 'internal scratch']
  %s0 = inlined_call_operand.vmem [shape: f32[128,128], index: 0, kind: input, shape index: {}]
  %s1 = inlined_call_operand.vmem [shape: f32[1,128], index: 1, kind: input, shape index: {}]
  %s2 = inlined_call_operand.vmem [shape: f32[1,128], index: 2, kind: input, shape index: {}]
  %s3 = inlined_call_operand.vmem [shape: bf16[128,128], index: 3, kind: input, shape index: {}]
  %s4 = inlined_call_operand.vmem [shape: f32[128,128], index: 4, kind: output, shape index: {}]
  %s5 = sld [smem:[#allocation0]]
  $region26: #{basic_block_forward.7} parent=0
    _
  %s7 = ssub.s32 1, %s5
  %s8 = scalar_select 0, %s7, %s5
  // Predicated region
  $region2: #{basic_block_forward.7} parent=0 // pred_check
    _
  $region3: #{basic_block_forward.7} parent=0 // pred_check_branch
    %10 = sbr.rel (0) target = $region5
  $region4: #{basic_block_forward.7} parent=0 // pred_region
    _
  $region5: #{basic_block_forward.7} parent=0 // pred_fallthru
    _
  // Predicated region
  $region6: #{basic_block_forward.7} parent=0 // pred_check
    _
  $region7: #{basic_block_forward.7} parent=0 // pred_check_branch
    %12 = sbr.rel (0) target = $region9
  $region8: #{basic_block_forward.7} parent=0 // pred_region
    _
  $region9: #{basic_block_forward.7} parent=0 // pred_fallthru
    _
  // Predicated region
  $region10: #{basic_block_forward.7} parent=0 // pred_check
    _
  $region11: #{basic_block_forward.7} parent=0 // pred_check_branch
    %14 = sbr.rel (0) target = $region13
  $region12: #{basic_block_forward.7} parent=0 // pred_region
    _
  $region13: #{basic_block_forward.7} parent=0 // pred_fallthru
    _
  // Predicated region
  $region14: #{basic_block_forward.7} parent=0 // pred_check
    _
  $region15: #{basic_block_forward.7} parent=0 // pred_check_branch
    %16 = sbr.rel (0) target = $region17
  $region16: #{basic_block_forward.7} parent=0 // pred_region
    _
  $region17: #{basic_block_forward.7} parent=0 // pred_fallthru
    _
  %v17 = vld [vmem:[%s0] sm:$0xff]
  %v18 = vld [vmem:[%s0 + $0x8] sm:$0xff]
  %v19 = vld [vmem:[%s0 + $0x10] sm:$0xff]
  %v20 = vld [vmem:[%s0 + $0x18] sm:$0xff]
  %v21 = vld [vmem:[%s0 + $0x20] sm:$0xff]
  %v22 = vld [vmem:[%s0 + $0x28] sm:$0xff]
  %v23 = vld [vmem:[%s0 + $0x30] sm:$0xff]
  %v24 = vld [vmem:[%s0 + $0x38] sm:$0xff]
  %v25 = vld [vmem:[%s0 + $0x40] sm:$0xff]
  %v26 = vld [vmem:[%s0 + $0x48] sm:$0xff]
  %v27 = vld [vmem:[%s0 + $0x50] sm:$0xff]
  %v28 = vld [vmem:[%s0 + $0x58] sm:$0xff]
  %v29 = vld [vmem:[%s0 + $0x60] sm:$0xff]
  %v30 = vld [vmem:[%s0 + $0x68] sm:$0xff]
  %v31 = vld [vmem:[%s0 + $0x70] sm:$0xff]
  %v32 = vld [vmem:[%s0 + $0x78] sm:$0xff]
  %v33 = vld [vmem:[%s1] sm:$0x1]
  %v35 = vlaneseq
  %v36 = vshrl.u32 %v35, 7
  %v37 = vsub.s32 0, %v36
  %v38 = vrot.slane %v33, %v37
  %v40 = vmul.f32 %v17, %v38
  %v41 = vmul.f32 %v18, %v38
  %v42 = vmul.f32 %v19, %v38
  %v43 = vmul.f32 %v20, %v38
  %v44 = vmul.f32 %v21, %v38
  %v45 = vmul.f32 %v22, %v38
  %v46 = vmul.f32 %v23, %v38
  %v47 = vmul.f32 %v24, %v38
  %v48 = vmul.f32 %v25, %v38
  %v49 = vmul.f32 %v26, %v38
  %v50 = vmul.f32 %v27, %v38
  %v51 = vmul.f32 %v28, %v38
  %v52 = vmul.f32 %v29, %v38
  %v53 = vmul.f32 %v30, %v38
  %v54 = vmul.f32 %v31, %v38
  %v55 = vmul.f32 %v32, %v38
  %v56 = vld [vmem:[%s2] sm:$0x1]
  %v58 = vlaneseq
  %v59 = vshrl.u32 %v58, 7
  %v60 = vsub.s32 0, %v59
  %v61 = vrot.slane %v56, %v60
  %v63 = vadd.f32 %v40, %v61
  %v64 = vadd.f32 %v41, %v61
  %v65 = vadd.f32 %v42, %v61
  %v66 = vadd.f32 %v43, %v61
  %v67 = vadd.f32 %v44, %v61
  %v68 = vadd.f32 %v45, %v61
  %v69 = vadd.f32 %v46, %v61
  %v70 = vadd.f32 %v47, %v61
  %v71 = vadd.f32 %v48, %v61
  %v72 = vadd.f32 %v49, %v61
  %v73 = vadd.f32 %v50, %v61
  %v74 = vadd.f32 %v51, %v61
  %v75 = vadd.f32 %v52, %v61
  %v76 = vadd.f32 %v53, %v61
  %v77 = vadd.f32 %v54, %v61
  %v78 = vadd.f32 %v55, %v61
  %v79 = vld [vmem:[%s3] sm:$0xf]
  %v80 = vld [vmem:[%s3 + $0x4] sm:$0xf]
  %v81 = vld [vmem:[%s3 + $0x8] sm:$0xf]
  %v82 = vld [vmem:[%s3 + $0xc] sm:$0xf]
  %v83 = vld [vmem:[%s3 + $0x10] sm:$0xf]
  %v84 = vld [vmem:[%s3 + $0x14] sm:$0xf]
  %v85 = vld [vmem:[%s3 + $0x18] sm:$0xf]
  %v86 = vld [vmem:[%s3 + $0x1c] sm:$0xf]
  %v87 = vld [vmem:[%s3 + $0x20] sm:$0xf]
  %v88 = vld [vmem:[%s3 + $0x24] sm:$0xf]
  %v89 = vld [vmem:[%s3 + $0x28] sm:$0xf]
  %v90 = vld [vmem:[%s3 + $0x2c] sm:$0xf]
  %v91 = vld [vmem:[%s3 + $0x30] sm:$0xf]
  %v92 = vld [vmem:[%s3 + $0x34] sm:$0xf]
  %v93 = vld [vmem:[%s3 + $0x38] sm:$0xf]
  %v94 = vld [vmem:[%s3 + $0x3c] sm:$0xf]
  %v95 = vunpack.c.l.bf16 %v79
  %v96 = vunpack.c.l.bf16 %v80
  %v97 = vunpack.c.l.bf16 %v81
  %v98 = vunpack.c.l.bf16 %v82
  %v99 = vunpack.c.l.bf16 %v83
  %v100 = vunpack.c.l.bf16 %v84
  %v101 = vunpack.c.l.bf16 %v85
  %v102 = vunpack.c.l.bf16 %v86
  %v103 = vunpack.c.l.bf16 %v87
  %v104 = vunpack.c.l.bf16 %v88
  %v105 = vunpack.c.l.bf16 %v89
  %v106 = vunpack.c.l.bf16 %v90
  %v107 = vunpack.c.l.bf16 %v91
  %v108 = vunpack.c.l.bf16 %v92
  %v109 = vunpack.c.l.bf16 %v93
  %v110 = vunpack.c.l.bf16 %v94
  %v111 = vadd.f32 %v63, %v95
  %v112 = vadd.f32 %v64, %v96
  %v113 = vadd.f32 %v65, %v97
  %v114 = vadd.f32 %v66, %v98
  %v115 = vadd.f32 %v67, %v99
  %v116 = vadd.f32 %v68, %v100
  %v117 = vadd.f32 %v69, %v101
  %v118 = vadd.f32 %v70, %v102
  %v119 = vadd.f32 %v71, %v103
  %v120 = vadd.f32 %v72, %v104
  %v121 = vadd.f32 %v73, %v105
  %v122 = vadd.f32 %v74, %v106
  %v123 = vadd.f32 %v75, %v107
  %v124 = vadd.f32 %v76, %v108
  %v125 = vadd.f32 %v77, %v109
  %v126 = vadd.f32 %v78, %v110
  %vm127 = vcmp.ge.f32.partialorder %v111, 0.0
  %vm128 = vcmp.ge.f32.partialorder %v112, 0.0
  %vm129 = vcmp.ge.f32.partialorder %v113, 0.0
  %vm130 = vcmp.ge.f32.partialorder %v114, 0.0
  %vm131 = vcmp.ge.f32.partialorder %v115, 0.0
  %vm132 = vcmp.ge.f32.partialorder %v116, 0.0
  %vm133 = vcmp.ge.f32.partialorder %v117, 0.0
  %vm134 = vcmp.ge.f32.partialorder %v118, 0.0
  %vm135 = vcmp.ge.f32.partialorder %v119, 0.0
  %vm136 = vcmp.ge.f32.partialorder %v120, 0.0
  %vm137 = vcmp.ge.f32.partialorder %v121, 0.0
  %vm138 = vcmp.ge.f32.partialorder %v122, 0.0
  %vm139 = vcmp.ge.f32.partialorder %v123, 0.0
  %vm140 = vcmp.ge.f32.partialorder %v124, 0.0
  %vm141 = vcmp.ge.f32.partialorder %v125, 0.0
  %vm142 = vcmp.ge.f32.partialorder %v126, 0.0
  %v143 = vmul.f32 %v111, 0.01
  %v144 = vmul.f32 %v112, 0.01
  %v145 = vmul.f32 %v113, 0.01
  %v146 = vmul.f32 %v114, 0.01
  %v147 = vmul.f32 %v115, 0.01
  %v148 = vmul.f32 %v116, 0.01
  %v149 = vmul.f32 %v117, 0.01
  %v150 = vmul.f32 %v118, 0.01
  %v151 = vmul.f32 %v119, 0.01
  %v152 = vmul.f32 %v120, 0.01
  %v153 = vmul.f32 %v121, 0.01
  %v154 = vmul.f32 %v122, 0.01
  %v155 = vmul.f32 %v123, 0.01
  %v156 = vmul.f32 %v124, 0.01
  %v157 = vmul.f32 %v125, 0.01
  %v158 = vmul.f32 %v126, 0.01
  %v159 = vsel %vm127, %v111, %v143
  %v160 = vsel %vm128, %v112, %v144
  %v161 = vsel %vm129, %v113, %v145
  %v162 = vsel %vm130, %v114, %v146
  %v163 = vsel %vm131, %v115, %v147
  %v164 = vsel %vm132, %v116, %v148
  %v165 = vsel %vm133, %v117, %v149
  %v166 = vsel %vm134, %v118, %v150
  %v167 = vsel %vm135, %v119, %v151
  %v168 = vsel %vm136, %v120, %v152
  %v169 = vsel %vm137, %v121, %v153
  %v170 = vsel %vm138, %v122, %v154
  %v171 = vsel %vm139, %v123, %v155
  %v172 = vsel %vm140, %v124, %v156
  %v173 = vsel %vm141, %v125, %v157
  %v174 = vsel %vm142, %v126, %v158
  %175 = vst [vmem:[%s4] sm:$0xff] %v159
  %176 = vst [vmem:[%s4 + $0x8] sm:$0xff] %v160
  %177 = vst [vmem:[%s4 + $0x10] sm:$0xff] %v161
  %178 = vst [vmem:[%s4 + $0x18] sm:$0xff] %v162
  %179 = vst [vmem:[%s4 + $0x20] sm:$0xff] %v163
  %180 = vst [vmem:[%s4 + $0x28] sm:$0xff] %v164
  %181 = vst [vmem:[%s4 + $0x30] sm:$0xff] %v165
  %182 = vst [vmem:[%s4 + $0x38] sm:$0xff] %v166
  %183 = vst [vmem:[%s4 + $0x40] sm:$0xff] %v167
  %184 = vst [vmem:[%s4 + $0x48] sm:$0xff] %v168
  %185 = vst [vmem:[%s4 + $0x50] sm:$0xff] %v169
  %186 = vst [vmem:[%s4 + $0x58] sm:$0xff] %v170
  %187 = vst [vmem:[%s4 + $0x60] sm:$0xff] %v171
  %188 = vst [vmem:[%s4 + $0x68] sm:$0xff] %v172
  %189 = vst [vmem:[%s4 + $0x70] sm:$0xff] %v173
  %190 = vst [vmem:[%s4 + $0x78] sm:$0xff] %v174
  // Predicated region
  $region18: #{basic_block_forward.7} parent=0 // pred_check
    _
  $region19: #{basic_block_forward.7} parent=0 // pred_check_branch
    %192 = sbr.rel (0) target = $region21
  $region20: #{basic_block_forward.7} parent=0 // pred_region
    _
  $region21: #{basic_block_forward.7} parent=0 // pred_fallthru
    _
  // Predicated region
  $region22: #{basic_block_forward.7} parent=0 // pred_check
    _
  $region23: #{basic_block_forward.7} parent=0 // pred_check_branch
    %194 = sbr.rel (0) target = $region25
  $region24: #{basic_block_forward.7} parent=0 // pred_region
    _
  $region25: #{basic_block_forward.7} parent=0 // pred_fallthru
    _

</llo_original>
